<compile_context>
chip_gen: v7x
topology: tpu7x:2x2x1
jax: 0.10.0
libtpu: 0.0.40
codegen_flags: <defaults>
</compile_context>

<pallas_src>
import functools

import jax
import jax.numpy as jnp
from jax import lax
from jax.experimental import pallas as pl
from jax.experimental.pallas import tpu as pltpu

EPS = 1e-5  # PyTorch GroupNorm default eps


# ------------------------- fused Pallas kernel -------------------------
def _fused_unet_kernel(x_ref, w1_ref, w2_ref, wr_ref, vec_ref, m_ref, o_ref, *, W):
    # x_ref : (1, Cin, HW)   activations, HW (=H*W) on the 128-lane axis
    # w1_ref: (4, Co, Cin)   conv1 2x2 weights, tap index = dh*2 + dw
    # w2_ref: (4, Co, Co)    conv2 2x2 weights
    # wr_ref: (Co, Cin)      1x1 residual conv weight
    # vec_ref: (10, Co, 1)   [b1, g1, be1, temb, b2, g2, be2, br, gr, ber]
    # m_ref : (3, 1, HW)     {w_ok, h_ok, w_ok*h_ok} tap-validity masks
    # o_ref : (1, Co, HW)
    x = x_ref[0]
    HW = x.shape[-1]

    b1, g1, be1, temb = vec_ref[0], vec_ref[1], vec_ref[2], vec_ref[3]
    b2, g2, be2 = vec_ref[4], vec_ref[5], vec_ref[6]
    br, gr, ber = vec_ref[7], vec_ref[8], vec_ref[9]
    m_w, m_h, m_hw = m_ref[0], m_ref[1], m_ref[2]

    def silu(v):
        # exp on the EUP; reciprocal instead of an explicit divide sequence
        # (approx=True is viable at real sizes; exact form kept for numerics).
        return v * pl.reciprocal(1.0 + jnp.exp(-v))

    def gn1(y, gamma, beta):
        # GroupNorm(num_groups=1) over the whole (C, HW) sample, one-pass f32.
        inv_n = 1.0 / y.size
        mu = jnp.sum(y) * inv_n
        var = jnp.sum(y * y) * inv_n - mu * mu
        return (y - mu) * lax.rsqrt(var + EPS) * gamma + beta

    def conv2x2(v, w_ref, bias):
        # PyTorch Conv2d(k=2, padding='same') pads (0 before, 1 after) per dim:
        #   out[h, w] = sum_{dh,dw} W[:, :, dh, dw] @ v[h+dh, w+dw]   (OOB -> 0)
        # On the flattened HW lane axis the (dh, dw) tap is a lane rotation by
        # dh*W + dw with wrapped positions zeroed by the precomputed masks, so
        # the conv is 4 small MXU matmuls with no im2col / HBM traffic.
        t01 = m_w * pltpu.roll(v, HW - 1, axis=1)        # (dh=0, dw=1)
        t10 = m_h * pltpu.roll(v, HW - W, axis=1)        # (dh=1, dw=0)
        t11 = m_hw * pltpu.roll(v, HW - W - 1, axis=1)   # (dh=1, dw=1)
        y = jnp.dot(w_ref[0], v, preferred_element_type=jnp.float32)
        y = y + jnp.dot(w_ref[1], t01, preferred_element_type=jnp.float32)
        y = y + jnp.dot(w_ref[2], t10, preferred_element_type=jnp.float32)
        y = y + jnp.dot(w_ref[3], t11, preferred_element_type=jnp.float32)
        return y + bias

    # conv1 -> GN -> SiLU, then + per-channel time embedding
    h = silu(gn1(conv2x2(x, w1_ref, b1), g1, be1)) + temb
    # conv2 -> GN -> SiLU
    h = silu(gn1(conv2x2(h, w2_ref, b2), g2, be2))
    # residual branch: 1x1 conv -> SiLU -> GN, added to the conv-block output
    yr = jnp.dot(wr_ref[...], x, preferred_element_type=jnp.float32) + br
    o_ref[0] = h + gn1(silu(yr), gr, ber)


# ------------------------- wrapper -------------------------
def _pack_w2x2(w):
    # torch Conv2d weight (Co, Ci, kh, kw) -> (kh*kw, Co, Ci); tap = dh*kw + dw
    co, ci, kh, kw = w.shape
    return jnp.transpose(w, (2, 3, 0, 1)).reshape(kh * kw, co, ci)


@jax.jit
def unet_layer_forward(x_nchw, t, P):
    x = x_nchw.astype(jnp.float32)
    B, Cin, H, W = x.shape
    HW = H * W
    Co = P["b1"].shape[0]

    # time_net MLP (t_dim -> 1024 -> Co): two tiny GEMVs, plain JAX.
    temb = jax.nn.silu(t @ P["tw1"] + P["tb1"]) @ P["tw2"] + P["tb2"]   # (Co,)

    w1p = _pack_w2x2(P["w1"])            # (4, Co, Cin)
    w2p = _pack_w2x2(P["w2"])            # (4, Co, Co)
    wrp = P["wr"].reshape(Co, Cin)       # 1x1 conv weight

    vecs = jnp.stack([P["b1"], P["g1"], P["be1"], temb,
                      P["b2"], P["g2"], P["be2"],
                      P["br"], P["gr"], P["ber"]], axis=0)
    vecs = vecs.astype(jnp.float32).reshape(10, Co, 1)

    # tap-validity masks on the flattened HW axis
    wi = jnp.arange(HW, dtype=jnp.int32) % W
    hi = jnp.arange(HW, dtype=jnp.int32) // W
    m_w = (wi < W - 1).astype(jnp.float32)
    m_h = (hi < H - 1).astype(jnp.float32)
    masks = jnp.stack([m_w, m_h, m_w * m_h], axis=0).reshape(3, 1, HW)

    out = pl.pallas_call(
        functools.partial(_fused_unet_kernel, W=W),
        out_shape=jax.ShapeDtypeStruct((B, Co, HW), jnp.float32),
        grid=(B,),
        in_specs=[
            pl.BlockSpec((1, Cin, HW), lambda b: (b, 0, 0)),
            pl.BlockSpec((4, Co, Cin), lambda b: (0, 0, 0)),
            pl.BlockSpec((4, Co, Co), lambda b: (0, 0, 0)),
            pl.BlockSpec((Co, Cin), lambda b: (0, 0)),
            pl.BlockSpec((10, Co, 1), lambda b: (0, 0, 0)),
            pl.BlockSpec((3, 1, HW), lambda b: (0, 0, 0)),
        ],
        out_specs=pl.BlockSpec((1, Co, HW), lambda b: (b, 0, 0)),
        compiler_params=pltpu.CompilerParams(
            dimension_semantics=("parallel",)),   # v7x: batch sharded across both TCs
    )(x.reshape(B, Cin, HW), w1p, w2p, wrp, vecs, masks)

    return out.reshape(B, Co, H, W)


# ------------------------- pure-JAX reference -------------------------
def _ref_forward(x, t, P):
    def conv(x, w, b, pad):
        y = lax.conv_general_dilated(x, w, (1, 1), pad,
                                     dimension_numbers=("NCHW", "OIHW", "NCHW"),
                                     precision=lax.Precision.HIGHEST)
        return y + b[None, :, None, None]

    def gn(v, g, be):
        mu = v.mean(axis=(1, 2, 3), keepdims=True)
        var = ((v - mu) ** 2).mean(axis=(1, 2, 3), keepdims=True)
        return (v - mu) / jnp.sqrt(var + EPS) * g[None, :, None, None] + be[None, :, None, None]

    silu = lambda v: v * jax.nn.sigmoid(v)
    temb = silu(t @ P["tw1"] + P["tb1"]) @ P["tw2"] + P["tb2"]
    h = silu(gn(conv(x, P["w1"], P["b1"], ((0, 1), (0, 1))), P["g1"], P["be1"]))
    h = h + temb[:, None, None]
    h = silu(gn(conv(h, P["w2"], P["b2"], ((0, 1), (0, 1))), P["g2"], P["be2"]))
    r = gn(silu(conv(x, P["wr"], P["br"], ((0, 0), (0, 0)))), P["gr"], P["ber"])
    return h + r


# ------------------------- main -------------------------
if __name__ == "__main__":
    B, Cin, Co, H, W = 2, 4, 8, 16, 16
    TDIM, HIDDEN = 32, 1024  # mlp_layers=(1024,) default

    key = jax.random.PRNGKey(0)
    ks = jax.random.split(key, 18)
    rn = lambda k, s, sc=0.1: sc * jax.random.normal(k, s, jnp.float32)

    P = dict(
        w1=rn(ks[0], (Co, Cin, 2, 2)), b1=rn(ks[1], (Co,)),
        g1=1.0 + rn(ks[2], (Co,)), be1=rn(ks[3], (Co,)),
        w2=rn(ks[4], (Co, Co, 2, 2)), b2=rn(ks[5], (Co,)),
        g2=1.0 + rn(ks[6], (Co,)), be2=rn(ks[7], (Co,)),
        wr=rn(ks[8], (Co, Cin, 1, 1)), br=rn(ks[9], (Co,)),
        gr=1.0 + rn(ks[10], (Co,)), ber=rn(ks[11], (Co,)),
        tw1=rn(ks[12], (TDIM, HIDDEN)), tb1=rn(ks[13], (HIDDEN,)),
        tw2=rn(ks[14], (HIDDEN, Co)), tb2=rn(ks[15], (Co,)),
    )

    x = jax.random.normal(ks[16], (B, Cin, H, W), jnp.float32)
    t = jax.random.normal(ks[17], (TDIM,), jnp.float32)

    out = jax.block_until_ready(unet_layer_forward(x, t, P))
    ref = jax.block_until_ready(_ref_forward(x, t, P))

    assert out.shape == (B, Co, H, W), out.shape
    assert jnp.allclose(out, ref, rtol=1e-2, atol=1e-2), float(jnp.max(jnp.abs(out - ref)))
    print("KERNEL_OK")
</pallas_src>

<mosaic_0001>
module attributes {stable_mosaic.version = 11 : i64} {
  func.func @_fused_unet_kernel(%arg0: i32, %arg1: memref<1x4x256xf32, #tpu.memory_space<vmem>>, %arg2: memref<4x8x4xf32, #tpu.memory_space<vmem>>, %arg3: memref<4x8x8xf32, #tpu.memory_space<vmem>>, %arg4: memref<8x4xf32, #tpu.memory_space<vmem>>, %arg5: memref<10x8x1xf32, #tpu.memory_space<vmem>>, %arg6: memref<3x1x256xf32, #tpu.memory_space<vmem>>, %arg7: memref<1x8x256xf32, #tpu.memory_space<vmem>>) attributes {dimension_semantics = [#tpu.dimension_semantics<parallel>], iteration_bounds = array<i64: 2>, scalar_prefetch = 0 : i64, scratch_operands = 0 : i64, tpu.core_type = #tpu.core_type<tc>, window_params = [{transform_indices = @transform_0, window_bounds = array<i64: 1, 4, 256>}, {pipeline_mode = #tpu.pipeline_mode<synchronous>, transform_indices = @transform_1, window_bounds = array<i64: 4, 8, 4>}, {pipeline_mode = #tpu.pipeline_mode<synchronous>, transform_indices = @transform_2, window_bounds = array<i64: 4, 8, 8>}, {pipeline_mode = #tpu.pipeline_mode<synchronous>, transform_indices = @transform_3, window_bounds = array<i64: 8, 4>}, {pipeline_mode = #tpu.pipeline_mode<synchronous>, transform_indices = @transform_4, window_bounds = array<i64: 10, 8, 1>}, {pipeline_mode = #tpu.pipeline_mode<synchronous>, transform_indices = @transform_5, window_bounds = array<i64: 3, 1, 256>}, {transform_indices = @transform_6, window_bounds = array<i64: 1, 8, 256>}]} {
    %c0 = arith.constant 0 : index
    %c0_0 = arith.constant 0 : index
    %c0_1 = arith.constant 0 : index
    %0 = vector.load %arg1[%c0, %c0_0, %c0_1] : memref<1x4x256xf32, #tpu.memory_space<vmem>>, vector<1x4x256xf32>
    %1 = vector.shape_cast %0 : vector<1x4x256xf32> to vector<4x256xf32>
    %c0_2 = arith.constant 0 : index
    %c0_3 = arith.constant 0 : index
    %c0_4 = arith.constant 0 : index
    %2 = vector.load %arg5[%c0_2, %c0_3, %c0_4] : memref<10x8x1xf32, #tpu.memory_space<vmem>>, vector<1x8x1xf32>
    %3 = vector.shape_cast %2 : vector<1x8x1xf32> to vector<8x1xf32>
    %c1 = arith.constant 1 : index
    %c0_5 = arith.constant 0 : index
    %c0_6 = arith.constant 0 : index
    %4 = vector.load %arg5[%c1, %c0_5, %c0_6] : memref<10x8x1xf32, #tpu.memory_space<vmem>>, vector<1x8x1xf32>
    %5 = vector.shape_cast %4 : vector<1x8x1xf32> to vector<8x1xf32>
    %c2 = arith.constant 2 : index
    %c0_7 = arith.constant 0 : index
    %c0_8 = arith.constant 0 : index
    %6 = vector.load %arg5[%c2, %c0_7, %c0_8] : memref<10x8x1xf32, #tpu.memory_space<vmem>>, vector<1x8x1xf32>
    %7 = vector.shape_cast %6 : vector<1x8x1xf32> to vector<8x1xf32>
    %c3 = arith.constant 3 : index
    %c0_9 = arith.constant 0 : index
    %c0_10 = arith.constant 0 : index
    %8 = vector.load %arg5[%c3, %c0_9, %c0_10] : memref<10x8x1xf32, #tpu.memory_space<vmem>>, vector<1x8x1xf32>
    %9 = vector.shape_cast %8 : vector<1x8x1xf32> to vector<8x1xf32>
    %c4 = arith.constant 4 : index
    %c0_11 = arith.constant 0 : index
    %c0_12 = arith.constant 0 : index
    %10 = vector.load %arg5[%c4, %c0_11, %c0_12] : memref<10x8x1xf32, #tpu.memory_space<vmem>>, vector<1x8x1xf32>
    %11 = vector.shape_cast %10 : vector<1x8x1xf32> to vector<8x1xf32>
    %c5 = arith.constant 5 : index
    %c0_13 = arith.constant 0 : index
    %c0_14 = arith.constant 0 : index
    %12 = vector.load %arg5[%c5, %c0_13, %c0_14] : memref<10x8x1xf32, #tpu.memory_space<vmem>>, vector<1x8x1xf32>
    %13 = vector.shape_cast %12 : vector<1x8x1xf32> to vector<8x1xf32>
    %c6 = arith.constant 6 : index
    %c0_15 = arith.constant 0 : index
    %c0_16 = arith.constant 0 : index
    %14 = vector.load %arg5[%c6, %c0_15, %c0_16] : memref<10x8x1xf32, #tpu.memory_space<vmem>>, vector<1x8x1xf32>
    %15 = vector.shape_cast %14 : vector<1x8x1xf32> to vector<8x1xf32>
    %c7 = arith.constant 7 : index
    %c0_17 = arith.constant 0 : index
    %c0_18 = arith.constant 0 : index
    %16 = vector.load %arg5[%c7, %c0_17, %c0_18] : memref<10x8x1xf32, #tpu.memory_space<vmem>>, vector<1x8x1xf32>
    %17 = vector.shape_cast %16 : vector<1x8x1xf32> to vector<8x1xf32>
    %c8 = arith.constant 8 : index
    %c0_19 = arith.constant 0 : index
    %c0_20 = arith.constant 0 : index
    %18 = vector.load %arg5[%c8, %c0_19, %c0_20] : memref<10x8x1xf32, #tpu.memory_space<vmem>>, vector<1x8x1xf32>
    %19 = vector.shape_cast %18 : vector<1x8x1xf32> to vector<8x1xf32>
    %c9 = arith.constant 9 : index
    %c0_21 = arith.constant 0 : index
    %c0_22 = arith.constant 0 : index
    %20 = vector.load %arg5[%c9, %c0_21, %c0_22] : memref<10x8x1xf32, #tpu.memory_space<vmem>>, vector<1x8x1xf32>
    %21 = vector.shape_cast %20 : vector<1x8x1xf32> to vector<8x1xf32>
    %c0_23 = arith.constant 0 : index
    %c0_24 = arith.constant 0 : index
    %c0_25 = arith.constant 0 : index
    %22 = vector.load %arg6[%c0_23, %c0_24, %c0_25] : memref<3x1x256xf32, #tpu.memory_space<vmem>>, vector<1x1x256xf32>
    %23 = vector.shape_cast %22 : vector<1x1x256xf32> to vector<1x256xf32>
    %c1_26 = arith.constant 1 : index
    %c0_27 = arith.constant 0 : index
    %c0_28 = arith.constant 0 : index
    %24 = vector.load %arg6[%c1_26, %c0_27, %c0_28] : memref<3x1x256xf32, #tpu.memory_space<vmem>>, vector<1x1x256xf32>
    %25 = vector.shape_cast %24 : vector<1x1x256xf32> to vector<1x256xf32>
    %c2_29 = arith.constant 2 : index
    %c0_30 = arith.constant 0 : index
    %c0_31 = arith.constant 0 : index
    %26 = vector.load %arg6[%c2_29, %c0_30, %c0_31] : memref<3x1x256xf32, #tpu.memory_space<vmem>>, vector<1x1x256xf32>
    %27 = vector.shape_cast %26 : vector<1x1x256xf32> to vector<1x256xf32>
    %c255_i32 = arith.constant 255 : i32
    %28 = tpu.dynamic_rotate %1 by %c255_i32 dim 1 : vector<4x256xf32>, i32 -> vector<4x256xf32>
    %29 = vector.broadcast %23 : vector<1x256xf32> to vector<4x256xf32>
    %30 = arith.mulf %29, %28 : vector<4x256xf32>
    %c240_i32 = arith.constant 240 : i32
    %31 = tpu.dynamic_rotate %1 by %c240_i32 dim 1 : vector<4x256xf32>, i32 -> vector<4x256xf32>
    %32 = vector.broadcast %25 : vector<1x256xf32> to vector<4x256xf32>
    %33 = arith.mulf %32, %31 : vector<4x256xf32>
    %c239_i32 = arith.constant 239 : i32
    %34 = tpu.dynamic_rotate %1 by %c239_i32 dim 1 : vector<4x256xf32>, i32 -> vector<4x256xf32>
    %35 = vector.broadcast %27 : vector<1x256xf32> to vector<4x256xf32>
    %36 = arith.mulf %35, %34 : vector<4x256xf32>
    %c0_32 = arith.constant 0 : index
    %c0_33 = arith.constant 0 : index
    %c0_34 = arith.constant 0 : index
    %37 = vector.load %arg2[%c0_32, %c0_33, %c0_34] : memref<4x8x4xf32, #tpu.memory_space<vmem>>, vector<1x8x4xf32>
    %38 = vector.shape_cast %37 : vector<1x8x4xf32> to vector<8x4xf32>
    %cst = arith.constant dense<0.000000e+00> : vector<8x256xf32>
    %39 = tpu.matmul %38, %1, %cst {dimension_numbers = #tpu.dot_dimension_numbers<[1], [0], [0], [1], [0, 0, 1, 1], [], []>} : vector<8x4xf32>, vector<4x256xf32>, vector<8x256xf32> -> vector<8x256xf32>
    %c1_35 = arith.constant 1 : index
    %c0_36 = arith.constant 0 : index
    %c0_37 = arith.constant 0 : index
    %40 = vector.load %arg2[%c1_35, %c0_36, %c0_37] : memref<4x8x4xf32, #tpu.memory_space<vmem>>, vector<1x8x4xf32>
    %41 = vector.shape_cast %40 : vector<1x8x4xf32> to vector<8x4xf32>
    %cst_38 = arith.constant dense<0.000000e+00> : vector<8x256xf32>
    %42 = tpu.matmul %41, %30, %cst_38 {dimension_numbers = #tpu.dot_dimension_numbers<[1], [0], [0], [1], [0, 0, 1, 1], [], []>} : vector<8x4xf32>, vector<4x256xf32>, vector<8x256xf32> -> vector<8x256xf32>
    %43 = arith.addf %39, %42 : vector<8x256xf32>
    %c2_39 = arith.constant 2 : index
    %c0_40 = arith.constant 0 : index
    %c0_41 = arith.constant 0 : index
    %44 = vector.load %arg2[%c2_39, %c0_40, %c0_41] : memref<4x8x4xf32, #tpu.memory_space<vmem>>, vector<1x8x4xf32>
    %45 = vector.shape_cast %44 : vector<1x8x4xf32> to vector<8x4xf32>
    %cst_42 = arith.constant dense<0.000000e+00> : vector<8x256xf32>
    %46 = tpu.matmul %45, %33, %cst_42 {dimension_numbers = #tpu.dot_dimension_numbers<[1], [0], [0], [1], [0, 0, 1, 1], [], []>} : vector<8x4xf32>, vector<4x256xf32>, vector<8x256xf32> -> vector<8x256xf32>
    %47 = arith.addf %43, %46 : vector<8x256xf32>
    %c3_43 = arith.constant 3 : index
    %c0_44 = arith.constant 0 : index
    %c0_45 = arith.constant 0 : index
    %48 = vector.load %arg2[%c3_43, %c0_44, %c0_45] : memref<4x8x4xf32, #tpu.memory_space<vmem>>, vector<1x8x4xf32>
    %49 = vector.shape_cast %48 : vector<1x8x4xf32> to vector<8x4xf32>
    %cst_46 = arith.constant dense<0.000000e+00> : vector<8x256xf32>
    %50 = tpu.matmul %49, %36, %cst_46 {dimension_numbers = #tpu.dot_dimension_numbers<[1], [0], [0], [1], [0, 0, 1, 1], [], []>} : vector<8x4xf32>, vector<4x256xf32>, vector<8x256xf32> -> vector<8x256xf32>
    %51 = arith.addf %47, %50 : vector<8x256xf32>
    %52 = vector.broadcast %3 : vector<8x1xf32> to vector<8x256xf32>
    %53 = arith.addf %51, %52 : vector<8x256xf32>
    %54 = vector.shape_cast %53 : vector<8x256xf32> to vector<1x8x256xf32>
    %cst_47 = arith.constant dense<0.000000e+00> : vector<1xf32>
    %55 = vector.multi_reduction <add>, %54, %cst_47 [1, 2] : vector<1x8x256xf32> to vector<1xf32>
    %56 = vector.shape_cast %55 : vector<1xf32> to vector<1x1x1xf32>
    %57 = vector.extract %56[0, 0, 0] : f32 from vector<1x1x1xf32>
    %cst_48 = arith.constant 4.8828125E-4 : f32
    %58 = arith.mulf %57, %cst_48 : f32
    %59 = arith.mulf %53, %53 : vector<8x256xf32>
    %60 = vector.shape_cast %59 : vector<8x256xf32> to vector<1x8x256xf32>
    %cst_49 = arith.constant dense<0.000000e+00> : vector<1xf32>
    %61 = vector.multi_reduction <add>, %60, %cst_49 [1, 2] : vector<1x8x256xf32> to vector<1xf32>
    %62 = vector.shape_cast %61 : vector<1xf32> to vector<1x1x1xf32>
    %63 = vector.extract %62[0, 0, 0] : f32 from vector<1x1x1xf32>
    %cst_50 = arith.constant 4.8828125E-4 : f32
    %64 = arith.mulf %63, %cst_50 : f32
    %65 = arith.mulf %58, %58 : f32
    %66 = arith.subf %64, %65 : f32
    %67 = vector.broadcast %58 : f32 to vector<8x256xf32>
    %68 = arith.subf %53, %67 : vector<8x256xf32>
    %cst_51 = arith.constant 9.99999974E-6 : f32
    %69 = arith.addf %66, %cst_51 : f32
    %70 = math.rsqrt %69 : f32
    %71 = vector.broadcast %70 : f32 to vector<8x256xf32>
    %72 = arith.mulf %68, %71 : vector<8x256xf32>
    %73 = vector.broadcast %5 : vector<8x1xf32> to vector<8x256xf32>
    %74 = arith.mulf %72, %73 : vector<8x256xf32>
    %75 = vector.broadcast %7 : vector<8x1xf32> to vector<8x256xf32>
    %76 = arith.addf %74, %75 : vector<8x256xf32>
    %cst_52 = arith.constant 0.000000e+00 : f32
    %77 = vector.broadcast %cst_52 : f32 to vector<8x256xf32>
    %78 = arith.subf %77, %76 : vector<8x256xf32>
    %79 = math.exp %78 : vector<8x256xf32>
    %cst_53 = arith.constant 1.000000e+00 : f32
    %80 = vector.broadcast %cst_53 : f32 to vector<8x256xf32>
    %81 = arith.addf %80, %79 : vector<8x256xf32>
    %82 = tpu.reciprocal %81 : vector<8x256xf32> -> vector<8x256xf32>
    %83 = arith.mulf %76, %82 : vector<8x256xf32>
    %84 = vector.broadcast %9 : vector<8x1xf32> to vector<8x256xf32>
    %85 = arith.addf %83, %84 : vector<8x256xf32>
    %c255_i32_54 = arith.constant 255 : i32
    %86 = tpu.dynamic_rotate %85 by %c255_i32_54 dim 1 : vector<8x256xf32>, i32 -> vector<8x256xf32>
    %87 = vector.broadcast %23 : vector<1x256xf32> to vector<8x256xf32>
    %88 = arith.mulf %87, %86 : vector<8x256xf32>
    %c240_i32_55 = arith.constant 240 : i32
    %89 = tpu.dynamic_rotate %85 by %c240_i32_55 dim 1 : vector<8x256xf32>, i32 -> vector<8x256xf32>
    %90 = vector.broadcast %25 : vector<1x256xf32> to vector<8x256xf32>
    %91 = arith.mulf %90, %89 : vector<8x256xf32>
    %c239_i32_56 = arith.constant 239 : i32
    %92 = tpu.dynamic_rotate %85 by %c239_i32_56 dim 1 : vector<8x256xf32>, i32 -> vector<8x256xf32>
    %93 = vector.broadcast %27 : vector<1x256xf32> to vector<8x256xf32>
    %94 = arith.mulf %93, %92 : vector<8x256xf32>
    %c0_57 = arith.constant 0 : index
    %c0_58 = arith.constant 0 : index
    %c0_59 = arith.constant 0 : index
    %95 = vector.load %arg3[%c0_57, %c0_58, %c0_59] : memref<4x8x8xf32, #tpu.memory_space<vmem>>, vector<1x8x8xf32>
    %96 = vector.shape_cast %95 : vector<1x8x8xf32> to vector<8x8xf32>
    %cst_60 = arith.constant dense<0.000000e+00> : vector<8x256xf32>
    %97 = tpu.matmul %96, %85, %cst_60 {dimension_numbers = #tpu.dot_dimension_numbers<[1], [0], [0], [1], [0, 0, 1, 1], [], []>} : vector<8x8xf32>, vector<8x256xf32>, vector<8x256xf32> -> vector<8x256xf32>
    %c1_61 = arith.constant 1 : index
    %c0_62 = arith.constant 0 : index
    %c0_63 = arith.constant 0 : index
    %98 = vector.load %arg3[%c1_61, %c0_62, %c0_63] : memref<4x8x8xf32, #tpu.memory_space<vmem>>, vector<1x8x8xf32>
    %99 = vector.shape_cast %98 : vector<1x8x8xf32> to vector<8x8xf32>
    %cst_64 = arith.constant dense<0.000000e+00> : vector<8x256xf32>
    %100 = tpu.matmul %99, %88, %cst_64 {dimension_numbers = #tpu.dot_dimension_numbers<[1], [0], [0], [1], [0, 0, 1, 1], [], []>} : vector<8x8xf32>, vector<8x256xf32>, vector<8x256xf32> -> vector<8x256xf32>
    %101 = arith.addf %97, %100 : vector<8x256xf32>
    %c2_65 = arith.constant 2 : index
    %c0_66 = arith.constant 0 : index
    %c0_67 = arith.constant 0 : index
    %102 = vector.load %arg3[%c2_65, %c0_66, %c0_67] : memref<4x8x8xf32, #tpu.memory_space<vmem>>, vector<1x8x8xf32>
    %103 = vector.shape_cast %102 : vector<1x8x8xf32> to vector<8x8xf32>
    %cst_68 = arith.constant dense<0.000000e+00> : vector<8x256xf32>
    %104 = tpu.matmul %103, %91, %cst_68 {dimension_numbers = #tpu.dot_dimension_numbers<[1], [0], [0], [1], [0, 0, 1, 1], [], []>} : vector<8x8xf32>, vector<8x256xf32>, vector<8x256xf32> -> vector<8x256xf32>
    %105 = arith.addf %101, %104 : vector<8x256xf32>
    %c3_69 = arith.constant 3 : index
    %c0_70 = arith.constant 0 : index
    %c0_71 = arith.constant 0 : index
    %106 = vector.load %arg3[%c3_69, %c0_70, %c0_71] : memref<4x8x8xf32, #tpu.memory_space<vmem>>, vector<1x8x8xf32>
    %107 = vector.shape_cast %106 : vector<1x8x8xf32> to vector<8x8xf32>
    %cst_72 = arith.constant dense<0.000000e+00> : vector<8x256xf32>
    %108 = tpu.matmul %107, %94, %cst_72 {dimension_numbers = #tpu.dot_dimension_numbers<[1], [0], [0], [1], [0, 0, 1, 1], [], []>} : vector<8x8xf32>, vector<8x256xf32>, vector<8x256xf32> -> vector<8x256xf32>
    %109 = arith.addf %105, %108 : vector<8x256xf32>
    %110 = vector.broadcast %11 : vector<8x1xf32> to vector<8x256xf32>
    %111 = arith.addf %109, %110 : vector<8x256xf32>
    %112 = vector.shape_cast %111 : vector<8x256xf32> to vector<1x8x256xf32>
    %cst_73 = arith.constant dense<0.000000e+00> : vector<1xf32>
    %113 = vector.multi_reduction <add>, %112, %cst_73 [1, 2] : vector<1x8x256xf32> to vector<1xf32>
    %114 = vector.shape_cast %113 : vector<1xf32> to vector<1x1x1xf32>
    %115 = vector.extract %114[0, 0, 0] : f32 from vector<1x1x1xf32>
    %cst_74 = arith.constant 4.8828125E-4 : f32
    %116 = arith.mulf %115, %cst_74 : f32
    %117 = arith.mulf %111, %111 : vector<8x256xf32>
    %118 = vector.shape_cast %117 : vector<8x256xf32> to vector<1x8x256xf32>
    %cst_75 = arith.constant dense<0.000000e+00> : vector<1xf32>
    %119 = vector.multi_reduction <add>, %118, %cst_75 [1, 2] : vector<1x8x256xf32> to vector<1xf32>
    %120 = vector.shape_cast %119 : vector<1xf32> to vector<1x1x1xf32>
    %121 = vector.extract %120[0, 0, 0] : f32 from vector<1x1x1xf32>
    %cst_76 = arith.constant 4.8828125E-4 : f32
    %122 = arith.mulf %121, %cst_76 : f32
    %123 = arith.mulf %116, %116 : f32
    %124 = arith.subf %122, %123 : f32
    %125 = vector.broadcast %116 : f32 to vector<8x256xf32>
    %126 = arith.subf %111, %125 : vector<8x256xf32>
    %cst_77 = arith.constant 9.99999974E-6 : f32
    %127 = arith.addf %124, %cst_77 : f32
    %128 = math.rsqrt %127 : f32
    %129 = vector.broadcast %128 : f32 to vector<8x256xf32>
    %130 = arith.mulf %126, %129 : vector<8x256xf32>
    %131 = vector.broadcast %13 : vector<8x1xf32> to vector<8x256xf32>
    %132 = arith.mulf %130, %131 : vector<8x256xf32>
    %133 = vector.broadcast %15 : vector<8x1xf32> to vector<8x256xf32>
    %134 = arith.addf %132, %133 : vector<8x256xf32>
    %cst_78 = arith.constant 0.000000e+00 : f32
    %135 = vector.broadcast %cst_78 : f32 to vector<8x256xf32>
    %136 = arith.subf %135, %134 : vector<8x256xf32>
    %137 = math.exp %136 : vector<8x256xf32>
    %cst_79 = arith.constant 1.000000e+00 : f32
    %138 = vector.broadcast %cst_79 : f32 to vector<8x256xf32>
    %139 = arith.addf %138, %137 : vector<8x256xf32>
    %140 = tpu.reciprocal %139 : vector<8x256xf32> -> vector<8x256xf32>
    %141 = arith.mulf %134, %140 : vector<8x256xf32>
    %c0_80 = arith.constant 0 : index
    %c0_81 = arith.constant 0 : index
    %142 = vector.load %arg4[%c0_80, %c0_81] : memref<8x4xf32, #tpu.memory_space<vmem>>, vector<8x4xf32>
    %cst_82 = arith.constant dense<0.000000e+00> : vector<8x256xf32>
    %143 = tpu.matmul %142, %1, %cst_82 {dimension_numbers = #tpu.dot_dimension_numbers<[1], [0], [0], [1], [0, 0, 1, 1], [], []>} : vector<8x4xf32>, vector<4x256xf32>, vector<8x256xf32> -> vector<8x256xf32>
    %144 = vector.broadcast %17 : vector<8x1xf32> to vector<8x256xf32>
    %145 = arith.addf %143, %144 : vector<8x256xf32>
    %cst_83 = arith.constant 0.000000e+00 : f32
    %146 = vector.broadcast %cst_83 : f32 to vector<8x256xf32>
    %147 = arith.subf %146, %145 : vector<8x256xf32>
    %148 = math.exp %147 : vector<8x256xf32>
    %cst_84 = arith.constant 1.000000e+00 : f32
    %149 = vector.broadcast %cst_84 : f32 to vector<8x256xf32>
    %150 = arith.addf %149, %148 : vector<8x256xf32>
    %151 = tpu.reciprocal %150 : vector<8x256xf32> -> vector<8x256xf32>
    %152 = arith.mulf %145, %151 : vector<8x256xf32>
    %153 = vector.shape_cast %152 : vector<8x256xf32> to vector<1x8x256xf32>
    %cst_85 = arith.constant dense<0.000000e+00> : vector<1xf32>
    %154 = vector.multi_reduction <add>, %153, %cst_85 [1, 2] : vector<1x8x256xf32> to vector<1xf32>
    %155 = vector.shape_cast %154 : vector<1xf32> to vector<1x1x1xf32>
    %156 = vector.extract %155[0, 0, 0] : f32 from vector<1x1x1xf32>
    %cst_86 = arith.constant 4.8828125E-4 : f32
    %157 = arith.mulf %156, %cst_86 : f32
    %158 = arith.mulf %152, %152 : vector<8x256xf32>
    %159 = vector.shape_cast %158 : vector<8x256xf32> to vector<1x8x256xf32>
    %cst_87 = arith.constant dense<0.000000e+00> : vector<1xf32>
    %160 = vector.multi_reduction <add>, %159, %cst_87 [1, 2] : vector<1x8x256xf32> to vector<1xf32>
    %161 = vector.shape_cast %160 : vector<1xf32> to vector<1x1x1xf32>
    %162 = vector.extract %161[0, 0, 0] : f32 from vector<1x1x1xf32>
    %cst_88 = arith.constant 4.8828125E-4 : f32
    %163 = arith.mulf %162, %cst_88 : f32
    %164 = arith.mulf %157, %157 : f32
    %165 = arith.subf %163, %164 : f32
    %166 = vector.broadcast %157 : f32 to vector<8x256xf32>
    %167 = arith.subf %152, %166 : vector<8x256xf32>
    %cst_89 = arith.constant 9.99999974E-6 : f32
    %168 = arith.addf %165, %cst_89 : f32
    %169 = math.rsqrt %168 : f32
    %170 = vector.broadcast %169 : f32 to vector<8x256xf32>
    %171 = arith.mulf %167, %170 : vector<8x256xf32>
    %172 = vector.broadcast %19 : vector<8x1xf32> to vector<8x256xf32>
    %173 = arith.mulf %171, %172 : vector<8x256xf32>
    %174 = vector.broadcast %21 : vector<8x1xf32> to vector<8x256xf32>
    %175 = arith.addf %173, %174 : vector<8x256xf32>
    %176 = arith.addf %141, %175 : vector<8x256xf32>
    %c0_90 = arith.constant 0 : index
    %c0_91 = arith.constant 0 : index
    %c0_92 = arith.constant 0 : index
    %177 = vector.load %arg7[%c0_90, %c0_91, %c0_92] : memref<1x8x256xf32, #tpu.memory_space<vmem>>, vector<1x8x256xf32>
    %178 = vector.shape_cast %177 : vector<1x8x256xf32> to vector<8x256xf32>
    %179 = vector.shape_cast %176 : vector<8x256xf32> to vector<1x8x256xf32>
    tpu.vector_store %arg7[%c0_90, %c0_91, %c0_92], %179 {strides = array<i32>} : memref<1x8x256xf32, #tpu.memory_space<vmem>>, vector<1x8x256xf32>,
    return
  }
  func.func @transform_0(%arg0: i32) -> (i32, i32, i32) {
    %c0_i32 = arith.constant 0 : i32
    %c0_i32_0 = arith.constant 0 : i32
    %c0_i32_1 = arith.constant 0 : i32
    return %arg0, %c0_i32, %c0_i32_0 : i32, i32, i32
  }
  func.func @transform_1(%arg0: i32) -> (i32, i32, i32) {
    %c0_i32 = arith.constant 0 : i32
    %c0_i32_0 = arith.constant 0 : i32
    %c0_i32_1 = arith.constant 0 : i32
    %c0_i32_2 = arith.constant 0 : i32
    return %c0_i32, %c0_i32_0, %c0_i32_1 : i32, i32, i32
  }
  func.func @transform_2(%arg0: i32) -> (i32, i32, i32) {
    %c0_i32 = arith.constant 0 : i32
    %c0_i32_0 = arith.constant 0 : i32
    %c0_i32_1 = arith.constant 0 : i32
    %c0_i32_2 = arith.constant 0 : i32
    return %c0_i32, %c0_i32_0, %c0_i32_1 : i32, i32, i32
  }
  func.func @transform_3(%arg0: i32) -> (i32, i32) {
    %c0_i32 = arith.constant 0 : i32
    %c0_i32_0 = arith.constant 0 : i32
    %c0_i32_1 = arith.constant 0 : i32
    return %c0_i32, %c0_i32_0 : i32, i32
  }
  func.func @transform_4(%arg0: i32) -> (i32, i32, i32) {
    %c0_i32 = arith.constant 0 : i32
    %c0_i32_0 = arith.constant 0 : i32
    %c0_i32_1 = arith.constant 0 : i32
    %c0_i32_2 = arith.constant 0 : i32
    return %c0_i32, %c0_i32_0, %c0_i32_1 : i32, i32, i32
  }
  func.func @transform_5(%arg0: i32) -> (i32, i32, i32) {
    %c0_i32 = arith.constant 0 : i32
    %c0_i32_0 = arith.constant 0 : i32
    %c0_i32_1 = arith.constant 0 : i32
    %c0_i32_2 = arith.constant 0 : i32
    return %c0_i32, %c0_i32_0, %c0_i32_1 : i32, i32, i32
  }
  func.func @transform_6(%arg0: i32) -> (i32, i32, i32) {
    %c0_i32 = arith.constant 0 : i32
    %c0_i32_0 = arith.constant 0 : i32
    %c0_i32_1 = arith.constant 0 : i32
    return %arg0, %c0_i32, %c0_i32_0 : i32, i32, i32
  }
}

</mosaic_0001>

<llo_original>
// kernel: unet_layer_forward.1
$region0: #{unet_layer_forward.1}
  #allocation0 [shape = 'u32[]', space=smem, size = 0x4, offset = 0x4, fixed_abs, tag = 'smem constant byte address 0x4 - core index']
  #allocation1 [shape = 'u32[144,128]{1,0:T(1,128)}', space=vmem, size = 0x12000, scoped, tag = 'internal scratch']
  %s0 = inlined_call_operand.vmem [shape: f32[2,4,256], index: 0, kind: input, shape index: {}]
  %s1 = inlined_call_operand.vmem [shape: f32[4,8,4], index: 1, kind: input, shape index: {}]
  %s2 = inlined_call_operand.vmem [shape: f32[4,8,8], index: 2, kind: input, shape index: {}]
  %s3 = inlined_call_operand.vmem [shape: f32[8,4], index: 3, kind: input, shape index: {}]
  %s4 = inlined_call_operand.vmem [shape: f32[10,8,1], index: 4, kind: input, shape index: {}]
  %s5 = inlined_call_operand.vmem [shape: f32[3,1,256], index: 5, kind: input, shape index: {}]
  %s6 = inlined_call_operand.vmem [shape: f32[2,8,256], index: 6, kind: output, shape index: {}]
  %s7 = sld [smem:[#allocation0]]
  $region57: #{unet_layer_forward.1} parent=0
    _
  %s9 = ssub.s32 1, %s7
  %s10 = scalar_select 0, %s9, %s7
  loop: start=0, step=1, limit=4
  $region2: #{unet_layer_forward.1} parent=0 // loop_pre_header
    _
  $region3: #{unet_layer_forward.1} parent=0 // loop_header
    %s12 = sphi 0, %s16
    %p13 = scmp.ge.s32.totalorder %s12, 4
    %s22 = sphi 0, %s24
    %s25 = sphi 0, %s22
    %s26 = sphi 0, %s25
    %s42 = sphi 0, %s26
    %s46 = sphi 0, %s46
    %s48 = sphi 0, %s46
    %s49 = sphi 0, %s48
    %s63 = sphi 0, %s49
    %s67 = sphi 0, %s67
    %s69 = sphi 0, %s67
    %s70 = sphi 0, %s69
    %s84 = sphi 0, %s70
    %s88 = sphi 0, %s88
    %s90 = sphi 0, %s88
    %s91 = sphi 0, %s90
    %s105 = sphi 0, %s91
    %s109 = sphi 0, %s109
    %s111 = sphi 0, %s109
    %s112 = sphi 0, %s111
    %s126 = sphi 0, %s112
    %s130 = sphi 0, %s130
    %s132 = sphi 0, %s130
    %s133 = sphi 0, %s132
    %s147 = sphi 0, %s133
    %s153 = sphi 0, %s155
    %s156 = sphi 0, %s153
    %s157 = sphi 0, %s156
    %s173 = sphi 0, %s157
  $region4: #{unet_layer_forward.1} parent=0 // loop_header_branch
    %15 = sbr.rel (%p13) target = $region8
  $region5: #{unet_layer_forward.1} parent=0 // loop_body
    %s17 = ssub.s32 %s12, 1
    %s18 = ssub.s32 %s12, 2
    %s19 = sadd.s32 %s12, 1
    %s20 = ssub.s32 %s12, %s19
    %p21 = scmp.eq.s32.totalorder %s20, 0
    %s23 = sadd.s32 %s22, 1
    %s24 = scalar_select %p21, %s22, %s23
    %p27 = pneg %p21
    %p28 = scmp.eq.s32.totalorder %s12, 1
    %p29 = por %p27, %p28
    %p30 = scmp.ne.s32.totalorder %s22, %s25
    %p31 = scmp.eq.s32.totalorder %s12, 0
    %p32 = por %p30, %p31
    %p33 = scmp.ne.s32.totalorder %s22, %s25
    %p34 = scmp.eq.s32.totalorder %s17, 1
    %p35 = por %p33, %p34
    %p36 = scmp.ne.s32.totalorder %s25, %s26
    %p37 = scmp.eq.s32.totalorder %s17, 0
    %p38 = por %p36, %p37
    %p39 = scmp.ne.s32.totalorder %s25, %s26
    %p40 = scmp.eq.s32.totalorder %s18, 1
    %p41 = por %p39, %p40
    %p43 = scmp.ne.s32.totalorder %s26, %s42
    %p44 = scmp.eq.s32.totalorder %s18, 0
    %p45 = por %p43, %p44
    %s47 = sadd.s32 %s46, 1
    %p50 = scmp.eq.s32.totalorder %s12, 1
    %p51 = scmp.ne.s32.totalorder %s46, %s48
    %p52 = scmp.eq.s32.totalorder %s12, 0
    %p53 = por %p51, %p52
    %p54 = scmp.ne.s32.totalorder %s46, %s48
    %p55 = scmp.eq.s32.totalorder %s17, 1
    %p56 = por %p54, %p55
    %p57 = scmp.ne.s32.totalorder %s48, %s49
    %p58 = scmp.eq.s32.totalorder %s17, 0
    %p59 = por %p57, %p58
    %p60 = scmp.ne.s32.totalorder %s48, %s49
    %p61 = scmp.eq.s32.totalorder %s18, 1
    %p62 = por %p60, %p61
    %p64 = scmp.ne.s32.totalorder %s49, %s63
    %p65 = scmp.eq.s32.totalorder %s18, 0
    %p66 = por %p64, %p65
    %s68 = sadd.s32 %s67, 1
    %p71 = scmp.eq.s32.totalorder %s12, 1
    %p72 = scmp.ne.s32.totalorder %s67, %s69
    %p73 = scmp.eq.s32.totalorder %s12, 0
    %p74 = por %p72, %p73
    %p75 = scmp.ne.s32.totalorder %s67, %s69
    %p76 = scmp.eq.s32.totalorder %s17, 1
    %p77 = por %p75, %p76
    %p78 = scmp.ne.s32.totalorder %s69, %s70
    %p79 = scmp.eq.s32.totalorder %s17, 0
    %p80 = por %p78, %p79
    %p81 = scmp.ne.s32.totalorder %s69, %s70
    %p82 = scmp.eq.s32.totalorder %s18, 1
    %p83 = por %p81, %p82
    %p85 = scmp.ne.s32.totalorder %s70, %s84
    %p86 = scmp.eq.s32.totalorder %s18, 0
    %p87 = por %p85, %p86
    %s89 = sadd.s32 %s88, 1
    %p92 = scmp.eq.s32.totalorder %s12, 1
    %p93 = scmp.ne.s32.totalorder %s88, %s90
    %p94 = scmp.eq.s32.totalorder %s12, 0
    %p95 = por %p93, %p94
    %p96 = scmp.ne.s32.totalorder %s88, %s90
    %p97 = scmp.eq.s32.totalorder %s17, 1
    %p98 = por %p96, %p97
    %p99 = scmp.ne.s32.totalorder %s90, %s91
    %p100 = scmp.eq.s32.totalorder %s17, 0
    %p101 = por %p99, %p100
    %p102 = scmp.ne.s32.totalorder %s90, %s91
    %p103 = scmp.eq.s32.totalorder %s18, 1
    %p104 = por %p102, %p103
    %p106 = scmp.ne.s32.totalorder %s91, %s105
    %p107 = scmp.eq.s32.totalorder %s18, 0
    %p108 = por %p106, %p107
    %s110 = sadd.s32 %s109, 1
    %p113 = scmp.eq.s32.totalorder %s12, 1
    %p114 = scmp.ne.s32.totalorder %s109, %s111
    %p115 = scmp.eq.s32.totalorder %s12, 0
    %p116 = por %p114, %p115
    %p117 = scmp.ne.s32.totalorder %s109, %s111
    %p118 = scmp.eq.s32.totalorder %s17, 1
    %p119 = por %p117, %p118
    %p120 = scmp.ne.s32.totalorder %s111, %s112
    %p121 = scmp.eq.s32.totalorder %s17, 0
    %p122 = por %p120, %p121
    %p123 = scmp.ne.s32.totalorder %s111, %s112
    %p124 = scmp.eq.s32.totalorder %s18, 1
    %p125 = por %p123, %p124
    %p127 = scmp.ne.s32.totalorder %s112, %s126
    %p128 = scmp.eq.s32.totalorder %s18, 0
    %p129 = por %p127, %p128
    %s131 = sadd.s32 %s130, 1
    %p134 = scmp.eq.s32.totalorder %s12, 1
    %p135 = scmp.ne.s32.totalorder %s130, %s132
    %p136 = scmp.eq.s32.totalorder %s12, 0
    %p137 = por %p135, %p136
    %p138 = scmp.ne.s32.totalorder %s130, %s132
    %p139 = scmp.eq.s32.totalorder %s17, 1
    %p140 = por %p138, %p139
    %p141 = scmp.ne.s32.totalorder %s132, %s133
    %p142 = scmp.eq.s32.totalorder %s17, 0
    %p143 = por %p141, %p142
    %p144 = scmp.ne.s32.totalorder %s132, %s133
    %p145 = scmp.eq.s32.totalorder %s18, 1
    %p146 = por %p144, %p145
    %p148 = scmp.ne.s32.totalorder %s133, %s147
    %p149 = scmp.eq.s32.totalorder %s18, 0
    %p150 = por %p148, %p149
    %s151 = ssub.s32 %s12, %s19
    %p152 = scmp.eq.s32.totalorder %s151, 0
    %s154 = sadd.s32 %s153, 1
    %s155 = scalar_select %p152, %s153, %s154
    %p158 = pneg %p152
    %p159 = scmp.eq.s32.totalorder %s12, 1
    %p160 = por %p158, %p159
    %p161 = scmp.ne.s32.totalorder %s153, %s156
    %p162 = scmp.eq.s32.totalorder %s12, 0
    %p163 = por %p161, %p162
    %p164 = scmp.ne.s32.totalorder %s153, %s156
    %p165 = scmp.eq.s32.totalorder %s17, 1
    %p166 = por %p164, %p165
    %p167 = scmp.ne.s32.totalorder %s156, %s157
    %p168 = scmp.eq.s32.totalorder %s17, 0
    %p169 = por %p167, %p168
    %p170 = scmp.ne.s32.totalorder %s156, %s157
    %p171 = scmp.eq.s32.totalorder %s18, 1
    %p172 = por %p170, %p171
    %p174 = scmp.ne.s32.totalorder %s157, %s173
    %p175 = scmp.eq.s32.totalorder %s18, 0
    %p176 = por %p174, %p175
    %p177 = scmp.le.s32.totalorder 1, %s12
    %p178 = scmp.lt.s32.totalorder %s12, 3
    %p179 = pnand %p177, %p178
    %p180 = pneg %p179
    // Predicated region
    $region9: #{unet_layer_forward.1} parent=5 // pred_check
      _
    $region10: #{unet_layer_forward.1} parent=5 // pred_check_branch
      %182 = sbr.rel (%p179) target = $region12
    $region11: #{unet_layer_forward.1} parent=5 // pred_region
      %s183 = ssub.s32 %s12, 1
      // Predicated region
      $region13: #{unet_layer_forward.1} parent=11 // pred_check
        %p184 = pneg %p59
      $region14: #{unet_layer_forward.1} parent=11 // pred_check_branch
        %186 = sbr.rel (%p184) target = $region16
      $region15: #{unet_layer_forward.1} parent=11 // pred_region
        _
      $region16: #{unet_layer_forward.1} parent=11 // pred_fallthru
        _
      // Predicated region
      $region17: #{unet_layer_forward.1} parent=11 // pred_check
        %p187 = pneg %p80
      $region18: #{unet_layer_forward.1} parent=11 // pred_check_branch
        %189 = sbr.rel (%p187) target = $region20
      $region19: #{unet_layer_forward.1} parent=11 // pred_region
        _
      $region20: #{unet_layer_forward.1} parent=11 // pred_fallthru
        _
      // Predicated region
      $region21: #{unet_layer_forward.1} parent=11 // pred_check
        %p190 = pneg %p101
      $region22: #{unet_layer_forward.1} parent=11 // pred_check_branch
        %192 = sbr.rel (%p190) target = $region24
      $region23: #{unet_layer_forward.1} parent=11 // pred_region
        _
      $region24: #{unet_layer_forward.1} parent=11 // pred_fallthru
        _
      // Predicated region
      $region25: #{unet_layer_forward.1} parent=11 // pred_check
        %p193 = pneg %p122
      $region26: #{unet_layer_forward.1} parent=11 // pred_check_branch
        %195 = sbr.rel (%p193) target = $region28
      $region27: #{unet_layer_forward.1} parent=11 // pred_region
        _
      $region28: #{unet_layer_forward.1} parent=11 // pred_fallthru
        _
      // Predicated region
      $region29: #{unet_layer_forward.1} parent=11 // pred_check
        %p196 = pneg %p143
      $region30: #{unet_layer_forward.1} parent=11 // pred_check_branch
        %198 = sbr.rel (%p196) target = $region32
      $region31: #{unet_layer_forward.1} parent=11 // pred_region
        _
      $region32: #{unet_layer_forward.1} parent=11 // pred_fallthru
        _
    $region12: #{unet_layer_forward.1} parent=5 // pred_fallthru
      _
    %p199 = scmp.lt.s32.totalorder %s12, 2
    // Predicated region
    $region33: #{unet_layer_forward.1} parent=5 // pred_check
      %p200 = pneg %p199
    $region34: #{unet_layer_forward.1} parent=5 // pred_check_branch
      %202 = sbr.rel (%p200) target = $region36
    $region35: #{unet_layer_forward.1} parent=5 // pred_region
      // Predicated region
      $region37: #{unet_layer_forward.1} parent=35 // pred_check
        %p203 = pneg %p32
      $region38: #{unet_layer_forward.1} parent=35 // pred_check_branch
        %205 = sbr.rel (%p203) target = $region40
      $region39: #{unet_layer_forward.1} parent=35 // pred_region
        %p206 = scmp.lt.s32.totalorder %s12, 1
        %s207 = scalar_select %p206, %s12, 1
        %s208 = smul.addr %s207, 2
        %s209 = smul.addr %s208, 4
        %s210 = scalar_lea.vmem %s0, %s209
      $region40: #{unet_layer_forward.1} parent=35 // pred_fallthru
        _
    $region36: #{unet_layer_forward.1} parent=5 // pred_fallthru
      _
    %p211 = scmp.le.s32.totalorder 1, %s12
    %p212 = scmp.lt.s32.totalorder %s12, 3
    %p213 = pnand %p211, %p212
    %p214 = pneg %p213
    // Predicated region
    $region41: #{unet_layer_forward.1} parent=5 // pred_check
      _
    $region42: #{unet_layer_forward.1} parent=5 // pred_check_branch
      %216 = sbr.rel (%p213) target = $region44
    $region43: #{unet_layer_forward.1} parent=5 // pred_region
      %s217 = ssub.s32 %s12, 1
      %p218 = scmp.lt.s32.totalorder %s17, 1
      %s219 = scalar_select %p218, %s17, 1
      %s220 = smul.addr %s219, 2
      %s221 = smul.addr %s220, 4
      %s222 = scalar_lea.vmem %s0, %s221
      %p223 = pneg %p38
      %p224 = pneg %p35
      %p225 = pneg %p59
      %p226 = pneg %p56
      %p227 = pneg %p80
      %p228 = pneg %p77
      %p229 = pneg %p101
      %p230 = pneg %p98
      %p231 = pneg %p122
      %p232 = pneg %p119
      %p233 = pneg %p143
      %p234 = pneg %p140
      %p235 = pneg %p169
      %p236 = pneg %p166
      %p237 = scmp.lt.s32.totalorder %s17, 1
      %s238 = scalar_select %p237, %s17, 1
      %s239 = smul.addr %s238, 2
      %s240 = smul.addr %s239, 8
      %s241 = scalar_lea.vmem %s6, %s240
      %p242 = scmp.lt.s32.totalorder %s17, 1
      %s243 = scalar_select %p242, %s17, 1
      %s244 = smul.addr %s243, 2
      %s245 = smul.addr %s244, 4
      %s246 = scalar_lea.vmem %s0, %s245
      %p247 = scmp.lt.s32.totalorder %s17, 1
      %s248 = scalar_select %p247, %s17, 1
      %s249 = smul.addr %s248, 2
      %s250 = smul.addr %s249, 8
      %s251 = scalar_lea.vmem %s6, %s250
      %v252 = vld [vmem:[%s246] sm:$0xff]
      %v253 = vld [vmem:[%s4] sm:$0xff]
      %s254 = scalar_lea.vmem %s4, 8
      %v255 = vld [vmem:[%s254] sm:$0xff]
      %s256 = scalar_lea.vmem %s4, 16
      %v257 = vld [vmem:[%s256] sm:$0xff]
      %s258 = scalar_lea.vmem %s4, 24
      %v259 = vld [vmem:[%s258] sm:$0xff]
      %s260 = scalar_lea.vmem %s4, 32
      %v261 = vld [vmem:[%s260] sm:$0xff]
      %s262 = scalar_lea.vmem %s4, 40
      %v263 = vld [vmem:[%s262] sm:$0xff]
      %s264 = scalar_lea.vmem %s4, 48
      %v265 = vld [vmem:[%s264] sm:$0xff]
      %s266 = scalar_lea.vmem %s4, 56
      %v267 = vld [vmem:[%s266] sm:$0xff]
      %s268 = scalar_lea.vmem %s4, 64
      %v269 = vld [vmem:[%s268] sm:$0xff]
      %s270 = scalar_lea.vmem %s4, 72
      %v271 = vld [vmem:[%s270] sm:$0xff]
      %v272 = vld [vmem:[%s5] sm:$0x3]
      %s273 = scalar_lea.vmem %s5, 2
      %v274 = vld [vmem:[%s273] sm:$0x3]
      %s275 = scalar_lea.vmem %s5, 4
      %v276 = vld [vmem:[%s275] sm:$0x3]
      %v278 = vcombine.high %v252, %v252
      %280 = vrot.lane.b32.xlu0 %v252, 127
      %v281 = vpop.permute.xlu0 %280
      %282 = vrot.lane.b32.xlu0 %v278, 127
      %v283 = vpop.permute.xlu0 %282
      %v284 = vlaneseq
      %v285 = vand.u32 %v284, 127
      %vm286 = vcmp.lt.s32.totalorder %v285, 127
      %v287 = vsel %vm286, %v281, %v283
      %v288 = vsel %vm286, %v283, %v281
      %v290 = vlaneseq
      %v291 = vshrl.u32 %v290, 7
      %v292 = vsub.s32 0, %v291
      %v293 = vrot.slane %v272, %v292
      %v294 = vlaneseq
      %v295 = vshrl.u32 %v294, 7
      %v296 = vsub.s32 1, %v295
      %v297 = vrot.slane %v272, %v296
      %v300 = vmul.f32 %v293, %v287
      %v301 = vmul.f32 %v297, %v288
      %302 = vrot.lane.b32.xlu0 %v252, 112
      %v303 = vpop.permute.xlu0 %302
      %304 = vrot.lane.b32.xlu0 %v278, 112
      %v305 = vpop.permute.xlu0 %304
      %vm306 = vcmp.lt.s32.totalorder %v285, 112
      %v307 = vsel %vm306, %v303, %v305
      %v308 = vsel %vm306, %v305, %v303
      %v310 = vlaneseq
      %v311 = vshrl.u32 %v310, 7
      %v312 = vsub.s32 0, %v311
      %v313 = vrot.slane %v274, %v312
      %v314 = vlaneseq
      %v315 = vshrl.u32 %v314, 7
      %v316 = vsub.s32 1, %v315
      %v317 = vrot.slane %v274, %v316
      %v320 = vmul.f32 %v313, %v307
      %v321 = vmul.f32 %v317, %v308
      %322 = vrot.lane.b32.xlu0 %v252, 111
      %v323 = vpop.permute.xlu0 %322
      %324 = vrot.lane.b32.xlu0 %v278, 111
      %v325 = vpop.permute.xlu0 %324
      %vm326 = vcmp.lt.s32.totalorder %v285, 111
      %v327 = vsel %vm326, %v323, %v325
      %v328 = vsel %vm326, %v325, %v323
      %v330 = vlaneseq
      %v331 = vshrl.u32 %v330, 7
      %v332 = vsub.s32 0, %v331
      %v333 = vrot.slane %v276, %v332
      %v334 = vlaneseq
      %v335 = vshrl.u32 %v334, 7
      %v336 = vsub.s32 1, %v335
      %v337 = vrot.slane %v276, %v336
      %v340 = vmul.f32 %v333, %v327
      %v341 = vmul.f32 %v337, %v328
      %v342 = vld [vmem:[%s1] sm:$0xff]
      %s343 = scalar_lea.vmem %s1, 8
      %v344 = vld [vmem:[%s343] sm:$0xff]
      %vm345 = vcmask 31744
      %v347 = vsel %vm345, %v344, 0
      %vm349 = vcmask 1043456
      %v351 = vsel %vm349, %v300, 0
      %v354 = vsel %vm349, %v301, 0
      %356 = vmatprep.subr.mxu0 %v354
      %357 = vmatpush1.msra.mxu0 %v351
      %358 = vmatprep.subr.mxu0 0.0
      %359 = vmatpush1.msra.mxu0 0.0
      %360 = vmatprep.subr.mxu0 0.0
      %361 = vmatpush1.msra.mxu0 0.0
      %362 = vmatprep.subr.mxu0 0.0
      %363 = vmatpush1.msra.mxu0 0.0
      %364 = vmatprep.subr.mxu0 0.0
      %365 = vmatpush1.msra.mxu0 0.0
      %366 = vmatprep.subr.mxu0 0.0
      %367 = vmatpush1.msra.mxu0 0.0
      %368 = vmatprep.subr.mxu0 0.0
      %369 = vmatpush1.msra.mxu0 0.0
      %370 = vmatprep.subr.mxu0 0.0
      %371 = vmatpush1.msra.mxu0 0.0
      %372 = vmatprep.subr.mxu0 0.0
      %373 = vmatpush1.msra.mxu0 0.0
      %374 = vmatprep.subr.mxu0 0.0
      %375 = vmatpush1.msra.mxu0 0.0
      %376 = vmatprep.subr.mxu0 0.0
      %377 = vmatpush1.msra.mxu0 0.0
      %378 = vmatprep.subr.mxu0 0.0
      %379 = vmatpush1.msra.mxu0 0.0
      %380 = vmatprep.subr.mxu0 0.0
      %381 = vmatpush1.msra.mxu0 0.0
      %382 = vmatprep.subr.mxu0 0.0
      %383 = vmatpush1.msra.mxu0 0.0
      %384 = vmatprep.subr.mxu0 0.0
      %385 = vmatpush1.msra.mxu0 0.0
      %386 = vmatprep.subr.mxu0 0.0
      %387 = vmatpush1.msra.mxu0 0.0
      %388 = vmatprep.subr.mxu0 0.0
      %389 = vmatpush1.msra.mxu0 0.0
      %390 = vmatprep.subr.mxu0 0.0
      %391 = vmatpush1.msra.mxu0 0.0
      %392 = vmatprep.subr.mxu0 0.0
      %393 = vmatpush1.msra.mxu0 0.0
      %394 = vmatprep.subr.mxu0 0.0
      %395 = vmatpush1.msra.mxu0 0.0
      %396 = vmatprep.subr.mxu0 0.0
      %397 = vmatpush1.msra.mxu0 0.0
      %398 = vmatprep.subr.mxu0 0.0
      %399 = vmatpush1.msra.mxu0 0.0
      %400 = vmatprep.subr.mxu0 0.0
      %401 = vmatpush1.msra.mxu0 0.0
      %402 = vmatprep.subr.mxu0 0.0
      %403 = vmatpush1.msra.mxu0 0.0
      %404 = vmatprep.subr.mxu0 0.0
      %405 = vmatpush1.msra.mxu0 0.0
      %406 = vmatprep.subr.mxu0 0.0
      %407 = vmatpush1.msra.mxu0 0.0
      %408 = vmatprep.subr.mxu0 0.0
      %409 = vmatpush1.msra.mxu0 0.0
      %410 = vmatprep.subr.mxu0 0.0
      %411 = vmatpush1.msra.mxu0 0.0
      %412 = vmatprep.subr.mxu0 0.0
      %413 = vmatpush1.msra.mxu0 0.0
      %414 = vmatprep.subr.mxu0 0.0
      %415 = vmatpush1.msra.mxu0 0.0
      %416 = vmatprep.subr.mxu0 0.0
      %417 = vmatpush1.msra.mxu0 0.0
      %418 = vmatprep.subr.mxu0 0.0
      %419 = vmatpush1.msra.mxu0 0.0
      %420 = vmatprep.mubr.f32.mxu0 0.0
      %421 = vmatmul.mubr.f32.gmra.mrb[0].mxu0 %v347
      %v422 = vpop.f32.mrb[0].mxu0
      %v423 = vadd.f32 0.0, %v422
      %v424 = vpop.f32.mrb[0].mxu0
      %v425 = vadd.f32 0.0, %v424
      %426 = vdwg.mxu0
      %v428 = vsel %vm345, %v342, 0
      %v430 = vsel %vm349, %v252, 0
      %v432 = vsel %vm349, %v278, 0
      %434 = vmatprep.subr.mxu0 %v432
      %435 = vmatpush1.msra.mxu0 %v430
      %436 = vmatprep.subr.mxu0 0.0
      %437 = vmatpush1.msra.mxu0 0.0
      %438 = vmatprep.subr.mxu0 0.0
      %439 = vmatpush1.msra.mxu0 0.0
      %440 = vmatprep.subr.mxu0 0.0
      %441 = vmatpush1.msra.mxu0 0.0
      %442 = vmatprep.subr.mxu0 0.0
      %443 = vmatpush1.msra.mxu0 0.0
      %444 = vmatprep.subr.mxu0 0.0
      %445 = vmatpush1.msra.mxu0 0.0
      %446 = vmatprep.subr.mxu0 0.0
      %447 = vmatpush1.msra.mxu0 0.0
      %448 = vmatprep.subr.mxu0 0.0
      %449 = vmatpush1.msra.mxu0 0.0
      %450 = vmatprep.subr.mxu0 0.0
      %451 = vmatpush1.msra.mxu0 0.0
      %452 = vmatprep.subr.mxu0 0.0
      %453 = vmatpush1.msra.mxu0 0.0
      %454 = vmatprep.subr.mxu0 0.0
      %455 = vmatpush1.msra.mxu0 0.0
      %456 = vmatprep.subr.mxu0 0.0
      %457 = vmatpush1.msra.mxu0 0.0
      %458 = vmatprep.subr.mxu0 0.0
      %459 = vmatpush1.msra.mxu0 0.0
      %460 = vmatprep.subr.mxu0 0.0
      %461 = vmatpush1.msra.mxu0 0.0
      %462 = vmatprep.subr.mxu0 0.0
      %463 = vmatpush1.msra.mxu0 0.0
      %464 = vmatprep.subr.mxu0 0.0
      %465 = vmatpush1.msra.mxu0 0.0
      %466 = vmatprep.subr.mxu0 0.0
      %467 = vmatpush1.msra.mxu0 0.0
      %468 = vmatprep.subr.mxu0 0.0
      %469 = vmatpush1.msra.mxu0 0.0
      %470 = vmatprep.subr.mxu0 0.0
      %471 = vmatpush1.msra.mxu0 0.0
      %472 = vmatprep.subr.mxu0 0.0
      %473 = vmatpush1.msra.mxu0 0.0
      %474 = vmatprep.subr.mxu0 0.0
      %475 = vmatpush1.msra.mxu0 0.0
      %476 = vmatprep.subr.mxu0 0.0
      %477 = vmatpush1.msra.mxu0 0.0
      %478 = vmatprep.subr.mxu0 0.0
      %479 = vmatpush1.msra.mxu0 0.0
      %480 = vmatprep.subr.mxu0 0.0
      %481 = vmatpush1.msra.mxu0 0.0
      %482 = vmatprep.subr.mxu0 0.0
      %483 = vmatpush1.msra.mxu0 0.0
      %484 = vmatprep.subr.mxu0 0.0
      %485 = vmatpush1.msra.mxu0 0.0
      %486 = vmatprep.subr.mxu0 0.0
      %487 = vmatpush1.msra.mxu0 0.0
      %488 = vmatprep.subr.mxu0 0.0
      %489 = vmatpush1.msra.mxu0 0.0
      %490 = vmatprep.subr.mxu0 0.0
      %491 = vmatpush1.msra.mxu0 0.0
      %492 = vmatprep.subr.mxu0 0.0
      %493 = vmatpush1.msra.mxu0 0.0
      %494 = vmatprep.subr.mxu0 0.0
      %495 = vmatpush1.msra.mxu0 0.0
      %496 = vmatprep.subr.mxu0 0.0
      %497 = vmatpush1.msra.mxu0 0.0
      %498 = vmatprep.mubr.f32.mxu0 0.0
      %499 = vmatmul.mubr.f32.gmra.mrb[0].mxu0 %v428
      %v500 = vpop.f32.mrb[0].mxu0
      %v501 = vadd.f32 %v423, %v500
      %v502 = vpop.f32.mrb[0].mxu0
      %v503 = vadd.f32 %v425, %v502
      %504 = vdwg.mxu0
      %s505 = scalar_lea.vmem %s1, 16
      %v506 = vld [vmem:[%s505] sm:$0xff]
      %v508 = vsel %vm345, %v506, 0
      %v511 = vsel %vm349, %v320, 0
      %v514 = vsel %vm349, %v321, 0
      %516 = vmatprep.subr.mxu0 %v514
      %517 = vmatpush1.msra.mxu0 %v511
      %518 = vmatprep.subr.mxu0 0.0
      %519 = vmatpush1.msra.mxu0 0.0
      %520 = vmatprep.subr.mxu0 0.0
      %521 = vmatpush1.msra.mxu0 0.0
      %522 = vmatprep.subr.mxu0 0.0
      %523 = vmatpush1.msra.mxu0 0.0
      %524 = vmatprep.subr.mxu0 0.0
      %525 = vmatpush1.msra.mxu0 0.0
      %526 = vmatprep.subr.mxu0 0.0
      %527 = vmatpush1.msra.mxu0 0.0
      %528 = vmatprep.subr.mxu0 0.0
      %529 = vmatpush1.msra.mxu0 0.0
      %530 = vmatprep.subr.mxu0 0.0
      %531 = vmatpush1.msra.mxu0 0.0
      %532 = vmatprep.subr.mxu0 0.0
      %533 = vmatpush1.msra.mxu0 0.0
      %534 = vmatprep.subr.mxu0 0.0
      %535 = vmatpush1.msra.mxu0 0.0
      %536 = vmatprep.subr.mxu0 0.0
      %537 = vmatpush1.msra.mxu0 0.0
      %538 = vmatprep.subr.mxu0 0.0
      %539 = vmatpush1.msra.mxu0 0.0
      %540 = vmatprep.subr.mxu0 0.0
      %541 = vmatpush1.msra.mxu0 0.0
      %542 = vmatprep.subr.mxu0 0.0
      %543 = vmatpush1.msra.mxu0 0.0
      %544 = vmatprep.subr.mxu0 0.0
      %545 = vmatpush1.msra.mxu0 0.0
      %546 = vmatprep.subr.mxu0 0.0
      %547 = vmatpush1.msra.mxu0 0.0
      %548 = vmatprep.subr.mxu0 0.0
      %549 = vmatpush1.msra.mxu0 0.0
      %550 = vmatprep.subr.mxu0 0.0
      %551 = vmatpush1.msra.mxu0 0.0
      %552 = vmatprep.subr.mxu0 0.0
      %553 = vmatpush1.msra.mxu0 0.0
      %554 = vmatprep.subr.mxu0 0.0
      %555 = vmatpush1.msra.mxu0 0.0
      %556 = vmatprep.subr.mxu0 0.0
      %557 = vmatpush1.msra.mxu0 0.0
      %558 = vmatprep.subr.mxu0 0.0
      %559 = vmatpush1.msra.mxu0 0.0
      %560 = vmatprep.subr.mxu0 0.0
      %561 = vmatpush1.msra.mxu0 0.0
      %562 = vmatprep.subr.mxu0 0.0
      %563 = vmatpush1.msra.mxu0 0.0
      %564 = vmatprep.subr.mxu0 0.0
      %565 = vmatpush1.msra.mxu0 0.0
      %566 = vmatprep.subr.mxu0 0.0
      %567 = vmatpush1.msra.mxu0 0.0
      %568 = vmatprep.subr.mxu0 0.0
      %569 = vmatpush1.msra.mxu0 0.0
      %570 = vmatprep.subr.mxu0 0.0
      %571 = vmatpush1.msra.mxu0 0.0
      %572 = vmatprep.subr.mxu0 0.0
      %573 = vmatpush1.msra.mxu0 0.0
      %574 = vmatprep.subr.mxu0 0.0
      %575 = vmatpush1.msra.mxu0 0.0
      %576 = vmatprep.subr.mxu0 0.0
      %577 = vmatpush1.msra.mxu0 0.0
      %578 = vmatprep.subr.mxu0 0.0
      %579 = vmatpush1.msra.mxu0 0.0
      %580 = vmatprep.mubr.f32.mxu0 0.0
      %581 = vmatmul.mubr.f32.gmra.mrb[0].mxu0 %v508
      %v582 = vpop.f32.mrb[0].mxu0
      %v583 = vadd.f32 0.0, %v582
      %v584 = vpop.f32.mrb[0].mxu0
      %v585 = vadd.f32 0.0, %v584
      %586 = vdwg.mxu0
      %v587 = vadd.f32 %v501, %v583
      %v588 = vadd.f32 %v503, %v585
      %s589 = scalar_lea.vmem %s1, 24
      %v590 = vld [vmem:[%s589] sm:$0xff]
      %v592 = vsel %vm345, %v590, 0
      %v595 = vsel %vm349, %v340, 0
      %v598 = vsel %vm349, %v341, 0
      %600 = vmatprep.subr.mxu0 %v598
      %601 = vmatpush1.msra.mxu0 %v595
      %602 = vmatprep.subr.mxu0 0.0
      %603 = vmatpush1.msra.mxu0 0.0
      %604 = vmatprep.subr.mxu0 0.0
      %605 = vmatpush1.msra.mxu0 0.0
      %606 = vmatprep.subr.mxu0 0.0
      %607 = vmatpush1.msra.mxu0 0.0
      %608 = vmatprep.subr.mxu0 0.0
      %609 = vmatpush1.msra.mxu0 0.0
      %610 = vmatprep.subr.mxu0 0.0
      %611 = vmatpush1.msra.mxu0 0.0
      %612 = vmatprep.subr.mxu0 0.0
      %613 = vmatpush1.msra.mxu0 0.0
      %614 = vmatprep.subr.mxu0 0.0
      %615 = vmatpush1.msra.mxu0 0.0
      %616 = vmatprep.subr.mxu0 0.0
      %617 = vmatpush1.msra.mxu0 0.0
      %618 = vmatprep.subr.mxu0 0.0
      %619 = vmatpush1.msra.mxu0 0.0
      %620 = vmatprep.subr.mxu0 0.0
      %621 = vmatpush1.msra.mxu0 0.0
      %622 = vmatprep.subr.mxu0 0.0
      %623 = vmatpush1.msra.mxu0 0.0
      %624 = vmatprep.subr.mxu0 0.0
      %625 = vmatpush1.msra.mxu0 0.0
      %626 = vmatprep.subr.mxu0 0.0
      %627 = vmatpush1.msra.mxu0 0.0
      %628 = vmatprep.subr.mxu0 0.0
      %629 = vmatpush1.msra.mxu0 0.0
      %630 = vmatprep.subr.mxu0 0.0
      %631 = vmatpush1.msra.mxu0 0.0
      %632 = vmatprep.subr.mxu0 0.0
      %633 = vmatpush1.msra.mxu0 0.0
      %634 = vmatprep.subr.mxu0 0.0
      %635 = vmatpush1.msra.mxu0 0.0
      %636 = vmatprep.subr.mxu0 0.0
      %637 = vmatpush1.msra.mxu0 0.0
      %638 = vmatprep.subr.mxu0 0.0
      %639 = vmatpush1.msra.mxu0 0.0
      %640 = vmatprep.subr.mxu0 0.0
      %641 = vmatpush1.msra.mxu0 0.0
      %642 = vmatprep.subr.mxu0 0.0
      %643 = vmatpush1.msra.mxu0 0.0
      %644 = vmatprep.subr.mxu0 0.0
      %645 = vmatpush1.msra.mxu0 0.0
      %646 = vmatprep.subr.mxu0 0.0
      %647 = vmatpush1.msra.mxu0 0.0
      %648 = vmatprep.subr.mxu0 0.0
      %649 = vmatpush1.msra.mxu0 0.0
      %650 = vmatprep.subr.mxu0 0.0
      %651 = vmatpush1.msra.mxu0 0.0
      %652 = vmatprep.subr.mxu0 0.0
      %653 = vmatpush1.msra.mxu0 0.0
      %654 = vmatprep.subr.mxu0 0.0
      %655 = vmatpush1.msra.mxu0 0.0
      %656 = vmatprep.subr.mxu0 0.0
      %657 = vmatpush1.msra.mxu0 0.0
      %658 = vmatprep.subr.mxu0 0.0
      %659 = vmatpush1.msra.mxu0 0.0
      %660 = vmatprep.subr.mxu0 0.0
      %661 = vmatpush1.msra.mxu0 0.0
      %662 = vmatprep.subr.mxu0 0.0
      %663 = vmatpush1.msra.mxu0 0.0
      %664 = vmatprep.mubr.f32.mxu0 0.0
      %665 = vmatmul.mubr.f32.gmra.mrb[0].mxu0 %v592
      %v666 = vpop.f32.mrb[0].mxu0
      %v667 = vadd.f32 0.0, %v666
      %v668 = vpop.f32.mrb[0].mxu0
      %v669 = vadd.f32 0.0, %v668
      %670 = vdwg.mxu0
      %v671 = vadd.f32 %v587, %v667
      %v672 = vadd.f32 %v588, %v669
      %674 = vset.pattern.permute.xlu0 0
      %675 = vperm.xlu0 %674, %v253
      %v676 = vpop.permute.xlu0 %675
      %v678 = vadd.f32 %v671, %v676
      %v679 = vadd.f32 %v672, %v676
      %v680 = vadd.f32 %v678, %v679
      %681 = vadd.xlane.f32.xlu0 %v680
      %v682 = vpop.xlane.xlu0 %681
      %v683 = vrot.slane %v682, 4
      %v684 = vadd.f32 %v682, %v683
      %v685 = vrot.slane %v684, 2
      %v686 = vadd.f32 %v684, %v685
      %v687 = vrot.slane %v686, 1
      %v688 = vadd.f32 %v686, %v687
      %s689 = vtos %v688
      %s690 = smul.f32 %s689, 0.00048828125
      %v691 = vmul.f32 %v678, %v678
      %v692 = vmul.f32 %v679, %v679
      %v693 = vadd.f32 %v691, %v692
      %694 = vadd.xlane.f32.xlu0 %v693
      %v695 = vpop.xlane.xlu0 %694
      %v696 = vrot.slane %v695, 4
      %v697 = vadd.f32 %v695, %v696
      %v698 = vrot.slane %v697, 2
      %v699 = vadd.f32 %v697, %v698
      %v700 = vrot.slane %v699, 1
      %v701 = vadd.f32 %v699, %v700
      %s702 = vtos %v701
      %s703 = smul.f32 %s702, 0.00048828125
      %s704 = smul.f32 %s690, %s690
      %s705 = ssub.f32 %s703, %s704
      %v706 = vstv %s690
      %v707 = vsub.f32 %v678, %v706
      %v708 = vsub.f32 %v679, %v706
      %s709 = sadd.f32 %s705, 1e-05
      %v710 = vstv %s709
      %v711 = vrsqrt.pop %v710
      %s712 = vtos %v711
      %v713 = vstv %s712
      %v714 = vmul.f32 %v707, %v713
      %v715 = vmul.f32 %v708, %v713
      %717 = vset.pattern.permute.xlu0 0
      %718 = vperm.xlu0 %717, %v255
      %v719 = vpop.permute.xlu0 %718
      %v721 = vmul.f32 %v714, %v719
      %v722 = vmul.f32 %v715, %v719
      %724 = vset.pattern.permute.xlu0 0
      %725 = vperm.xlu0 %724, %v257
      %v726 = vpop.permute.xlu0 %725
      %v728 = vadd.f32 %v721, %v726
      %v729 = vadd.f32 %v722, %v726
      %v730 = vsub.f32 0.0, %v728
      %v731 = vsub.f32 0.0, %v729
      %v732 = vmul.f32 %v730, 1.442695
      %v733 = vpow.pop %v732
      %v734 = vmul.f32 %v731, 1.442695
      %v735 = vpow.pop %v734
      %v736 = vadd.f32 %v733, 1.0
      %v737 = vadd.f32 %v735, 1.0
      %v738 = vrcp.pop %v736
      %v739 = vrcp.pop %v737
      %v740 = vmul.f32 %v728, %v738
      %v741 = vmul.f32 %v729, %v739
      %743 = vset.pattern.permute.xlu0 0
      %744 = vperm.xlu0 %743, %v259
      %v745 = vpop.permute.xlu0 %744
      %v747 = vadd.f32 %v740, %v745
      %v748 = vadd.f32 %v741, %v745
      %749 = vrot.lane.b32.xlu0 %v747, 127
      %v750 = vpop.permute.xlu0 %749
      %751 = vrot.lane.b32.xlu0 %v748, 127
      %v752 = vpop.permute.xlu0 %751
      %v753 = vsel %vm286, %v750, %v752
      %v754 = vsel %vm286, %v752, %v750
      %v755 = vmul.f32 %v293, %v753
      %v756 = vmul.f32 %v297, %v754
      %757 = vrot.lane.b32.xlu0 %v747, 112
      %v758 = vpop.permute.xlu0 %757
      %759 = vrot.lane.b32.xlu0 %v748, 112
      %v760 = vpop.permute.xlu0 %759
      %v761 = vsel %vm306, %v758, %v760
      %v762 = vsel %vm306, %v760, %v758
      %v763 = vmul.f32 %v313, %v761
      %v764 = vmul.f32 %v317, %v762
      %765 = vrot.lane.b32.xlu0 %v747, 111
      %v766 = vpop.permute.xlu0 %765
      %767 = vrot.lane.b32.xlu0 %v748, 111
      %v768 = vpop.permute.xlu0 %767
      %v769 = vsel %vm326, %v766, %v768
      %v770 = vsel %vm326, %v768, %v766
      %v771 = vmul.f32 %v333, %v769
      %v772 = vmul.f32 %v337, %v770
      %v773 = vld [vmem:[%s2] sm:$0xff]
      %s774 = scalar_lea.vmem %s2, 8
      %v775 = vld [vmem:[%s774] sm:$0xff]
      %vm776 = vcmask 64512
      %v778 = vsel %vm776, %v775, 0
      %780 = vmatprep.subr.mxu0 %v756
      %781 = vmatpush1.msra.mxu0 %v755
      %782 = vmatprep.subr.mxu0 0.0
      %783 = vmatpush1.msra.mxu0 0.0
      %784 = vmatprep.subr.mxu0 0.0
      %785 = vmatpush1.msra.mxu0 0.0
      %786 = vmatprep.subr.mxu0 0.0
      %787 = vmatpush1.msra.mxu0 0.0
      %788 = vmatprep.subr.mxu0 0.0
      %789 = vmatpush1.msra.mxu0 0.0
      %790 = vmatprep.subr.mxu0 0.0
      %791 = vmatpush1.msra.mxu0 0.0
      %792 = vmatprep.subr.mxu0 0.0
      %793 = vmatpush1.msra.mxu0 0.0
      %794 = vmatprep.subr.mxu0 0.0
      %795 = vmatpush1.msra.mxu0 0.0
      %796 = vmatprep.subr.mxu0 0.0
      %797 = vmatpush1.msra.mxu0 0.0
      %798 = vmatprep.subr.mxu0 0.0
      %799 = vmatpush1.msra.mxu0 0.0
      %800 = vmatprep.subr.mxu0 0.0
      %801 = vmatpush1.msra.mxu0 0.0
      %802 = vmatprep.subr.mxu0 0.0
      %803 = vmatpush1.msra.mxu0 0.0
      %804 = vmatprep.subr.mxu0 0.0
      %805 = vmatpush1.msra.mxu0 0.0
      %806 = vmatprep.subr.mxu0 0.0
      %807 = vmatpush1.msra.mxu0 0.0
      %808 = vmatprep.subr.mxu0 0.0
      %809 = vmatpush1.msra.mxu0 0.0
      %810 = vmatprep.subr.mxu0 0.0
      %811 = vmatpush1.msra.mxu0 0.0
      %812 = vmatprep.subr.mxu0 0.0
      %813 = vmatpush1.msra.mxu0 0.0
      %814 = vmatprep.subr.mxu0 0.0
      %815 = vmatpush1.msra.mxu0 0.0
      %816 = vmatprep.subr.mxu0 0.0
      %817 = vmatpush1.msra.mxu0 0.0
      %818 = vmatprep.subr.mxu0 0.0
      %819 = vmatpush1.msra.mxu0 0.0
      %820 = vmatprep.subr.mxu0 0.0
      %821 = vmatpush1.msra.mxu0 0.0
      %822 = vmatprep.subr.mxu0 0.0
      %823 = vmatpush1.msra.mxu0 0.0
      %824 = vmatprep.subr.mxu0 0.0
      %825 = vmatpush1.msra.mxu0 0.0
      %826 = vmatprep.subr.mxu0 0.0
      %827 = vmatpush1.msra.mxu0 0.0
      %828 = vmatprep.subr.mxu0 0.0
      %829 = vmatpush1.msra.mxu0 0.0
      %830 = vmatprep.subr.mxu0 0.0
      %831 = vmatpush1.msra.mxu0 0.0
      %832 = vmatprep.subr.mxu0 0.0
      %833 = vmatpush1.msra.mxu0 0.0
      %834 = vmatprep.subr.mxu0 0.0
      %835 = vmatpush1.msra.mxu0 0.0
      %836 = vmatprep.subr.mxu0 0.0
      %837 = vmatpush1.msra.mxu0 0.0
      %838 = vmatprep.subr.mxu0 0.0
      %839 = vmatpush1.msra.mxu0 0.0
      %840 = vmatprep.subr.mxu0 0.0
      %841 = vmatpush1.msra.mxu0 0.0
      %842 = vmatprep.subr.mxu0 0.0
      %843 = vmatpush1.msra.mxu0 0.0
      %844 = vmatprep.mubr.f32.mxu0 0.0
      %845 = vmatmul.mubr.f32.gmra.mrb[0].mxu0 %v778
      %v846 = vpop.f32.mrb[0].mxu0
      %v847 = vadd.f32 0.0, %v846
      %v848 = vpop.f32.mrb[0].mxu0
      %v849 = vadd.f32 0.0, %v848
      %850 = vdwg.mxu0
      %v852 = vsel %vm776, %v773, 0
      %854 = vmatprep.subr.mxu0 %v748
      %855 = vmatpush1.msra.mxu0 %v747
      %856 = vmatprep.subr.mxu0 0.0
      %857 = vmatpush1.msra.mxu0 0.0
      %858 = vmatprep.subr.mxu0 0.0
      %859 = vmatpush1.msra.mxu0 0.0
      %860 = vmatprep.subr.mxu0 0.0
      %861 = vmatpush1.msra.mxu0 0.0
      %862 = vmatprep.subr.mxu0 0.0
      %863 = vmatpush1.msra.mxu0 0.0
      %864 = vmatprep.subr.mxu0 0.0
      %865 = vmatpush1.msra.mxu0 0.0
      %866 = vmatprep.subr.mxu0 0.0
      %867 = vmatpush1.msra.mxu0 0.0
      %868 = vmatprep.subr.mxu0 0.0
      %869 = vmatpush1.msra.mxu0 0.0
      %870 = vmatprep.subr.mxu0 0.0
      %871 = vmatpush1.msra.mxu0 0.0
      %872 = vmatprep.subr.mxu0 0.0
      %873 = vmatpush1.msra.mxu0 0.0
      %874 = vmatprep.subr.mxu0 0.0
      %875 = vmatpush1.msra.mxu0 0.0
      %876 = vmatprep.subr.mxu0 0.0
      %877 = vmatpush1.msra.mxu0 0.0
      %878 = vmatprep.subr.mxu0 0.0
      %879 = vmatpush1.msra.mxu0 0.0
      %880 = vmatprep.subr.mxu0 0.0
      %881 = vmatpush1.msra.mxu0 0.0
      %882 = vmatprep.subr.mxu0 0.0
      %883 = vmatpush1.msra.mxu0 0.0
      %884 = vmatprep.subr.mxu0 0.0
      %885 = vmatpush1.msra.mxu0 0.0
      %886 = vmatprep.subr.mxu0 0.0
      %887 = vmatpush1.msra.mxu0 0.0
      %888 = vmatprep.subr.mxu0 0.0
      %889 = vmatpush1.msra.mxu0 0.0
      %890 = vmatprep.subr.mxu0 0.0
      %891 = vmatpush1.msra.mxu0 0.0
      %892 = vmatprep.subr.mxu0 0.0
      %893 = vmatpush1.msra.mxu0 0.0
      %894 = vmatprep.subr.mxu0 0.0
      %895 = vmatpush1.msra.mxu0 0.0
      %896 = vmatprep.subr.mxu0 0.0
      %897 = vmatpush1.msra.mxu0 0.0
      %898 = vmatprep.subr.mxu0 0.0
      %899 = vmatpush1.msra.mxu0 0.0
      %900 = vmatprep.subr.mxu0 0.0
      %901 = vmatpush1.msra.mxu0 0.0
      %902 = vmatprep.subr.mxu0 0.0
      %903 = vmatpush1.msra.mxu0 0.0
      %904 = vmatprep.subr.mxu0 0.0
      %905 = vmatpush1.msra.mxu0 0.0
      %906 = vmatprep.subr.mxu0 0.0
      %907 = vmatpush1.msra.mxu0 0.0
      %908 = vmatprep.subr.mxu0 0.0
      %909 = vmatpush1.msra.mxu0 0.0
      %910 = vmatprep.subr.mxu0 0.0
      %911 = vmatpush1.msra.mxu0 0.0
      %912 = vmatprep.subr.mxu0 0.0
      %913 = vmatpush1.msra.mxu0 0.0
      %914 = vmatprep.subr.mxu0 0.0
      %915 = vmatpush1.msra.mxu0 0.0
      %916 = vmatprep.subr.mxu0 0.0
      %917 = vmatpush1.msra.mxu0 0.0
      %918 = vmatprep.mubr.f32.mxu0 0.0
      %919 = vmatmul.mubr.f32.gmra.mrb[0].mxu0 %v852
      %v920 = vpop.f32.mrb[0].mxu0
      %v921 = vadd.f32 %v847, %v920
      %v922 = vpop.f32.mrb[0].mxu0
      %v923 = vadd.f32 %v849, %v922
      %924 = vdwg.mxu0
      %s925 = scalar_lea.vmem %s2, 16
      %v926 = vld [vmem:[%s925] sm:$0xff]
      %v928 = vsel %vm776, %v926, 0
      %930 = vmatprep.subr.mxu0 %v764
      %931 = vmatpush1.msra.mxu0 %v763
      %932 = vmatprep.subr.mxu0 0.0
      %933 = vmatpush1.msra.mxu0 0.0
      %934 = vmatprep.subr.mxu0 0.0
      %935 = vmatpush1.msra.mxu0 0.0
      %936 = vmatprep.subr.mxu0 0.0
      %937 = vmatpush1.msra.mxu0 0.0
      %938 = vmatprep.subr.mxu0 0.0
      %939 = vmatpush1.msra.mxu0 0.0
      %940 = vmatprep.subr.mxu0 0.0
      %941 = vmatpush1.msra.mxu0 0.0
      %942 = vmatprep.subr.mxu0 0.0
      %943 = vmatpush1.msra.mxu0 0.0
      %944 = vmatprep.subr.mxu0 0.0
      %945 = vmatpush1.msra.mxu0 0.0
      %946 = vmatprep.subr.mxu0 0.0
      %947 = vmatpush1.msra.mxu0 0.0
      %948 = vmatprep.subr.mxu0 0.0
      %949 = vmatpush1.msra.mxu0 0.0
      %950 = vmatprep.subr.mxu0 0.0
      %951 = vmatpush1.msra.mxu0 0.0
      %952 = vmatprep.subr.mxu0 0.0
      %953 = vmatpush1.msra.mxu0 0.0
      %954 = vmatprep.subr.mxu0 0.0
      %955 = vmatpush1.msra.mxu0 0.0
      %956 = vmatprep.subr.mxu0 0.0
      %957 = vmatpush1.msra.mxu0 0.0
      %958 = vmatprep.subr.mxu0 0.0
      %959 = vmatpush1.msra.mxu0 0.0
      %960 = vmatprep.subr.mxu0 0.0
      %961 = vmatpush1.msra.mxu0 0.0
      %962 = vmatprep.subr.mxu0 0.0
      %963 = vmatpush1.msra.mxu0 0.0
      %964 = vmatprep.subr.mxu0 0.0
      %965 = vmatpush1.msra.mxu0 0.0
      %966 = vmatprep.subr.mxu0 0.0
      %967 = vmatpush1.msra.mxu0 0.0
      %968 = vmatprep.subr.mxu0 0.0
      %969 = vmatpush1.msra.mxu0 0.0
      %970 = vmatprep.subr.mxu0 0.0
      %971 = vmatpush1.msra.mxu0 0.0
      %972 = vmatprep.subr.mxu0 0.0
      %973 = vmatpush1.msra.mxu0 0.0
      %974 = vmatprep.subr.mxu0 0.0
      %975 = vmatpush1.msra.mxu0 0.0
      %976 = vmatprep.subr.mxu0 0.0
      %977 = vmatpush1.msra.mxu0 0.0
      %978 = vmatprep.subr.mxu0 0.0
      %979 = vmatpush1.msra.mxu0 0.0
      %980 = vmatprep.subr.mxu0 0.0
      %981 = vmatpush1.msra.mxu0 0.0
      %982 = vmatprep.subr.mxu0 0.0
      %983 = vmatpush1.msra.mxu0 0.0
      %984 = vmatprep.subr.mxu0 0.0
      %985 = vmatpush1.msra.mxu0 0.0
      %986 = vmatprep.subr.mxu0 0.0
      %987 = vmatpush1.msra.mxu0 0.0
      %988 = vmatprep.subr.mxu0 0.0
      %989 = vmatpush1.msra.mxu0 0.0
      %990 = vmatprep.subr.mxu0 0.0
      %991 = vmatpush1.msra.mxu0 0.0
      %992 = vmatprep.subr.mxu0 0.0
      %993 = vmatpush1.msra.mxu0 0.0
      %994 = vmatprep.mubr.f32.mxu0 0.0
      %995 = vmatmul.mubr.f32.gmra.mrb[0].mxu0 %v928
      %v996 = vpop.f32.mrb[0].mxu0
      %v997 = vadd.f32 0.0, %v996
      %v998 = vpop.f32.mrb[0].mxu0
      %v999 = vadd.f32 0.0, %v998
      %1000 = vdwg.mxu0
      %v1001 = vadd.f32 %v921, %v997
      %v1002 = vadd.f32 %v923, %v999
      %s1003 = scalar_lea.vmem %s2, 24
      %v1004 = vld [vmem:[%s1003] sm:$0xff]
      %v1006 = vsel %vm776, %v1004, 0
      %1008 = vmatprep.subr.mxu0 %v772
      %1009 = vmatpush1.msra.mxu0 %v771
      %1010 = vmatprep.subr.mxu0 0.0
      %1011 = vmatpush1.msra.mxu0 0.0
      %1012 = vmatprep.subr.mxu0 0.0
      %1013 = vmatpush1.msra.mxu0 0.0
      %1014 = vmatprep.subr.mxu0 0.0
      %1015 = vmatpush1.msra.mxu0 0.0
      %1016 = vmatprep.subr.mxu0 0.0
      %1017 = vmatpush1.msra.mxu0 0.0
      %1018 = vmatprep.subr.mxu0 0.0
      %1019 = vmatpush1.msra.mxu0 0.0
      %1020 = vmatprep.subr.mxu0 0.0
      %1021 = vmatpush1.msra.mxu0 0.0
      %1022 = vmatprep.subr.mxu0 0.0
      %1023 = vmatpush1.msra.mxu0 0.0
      %1024 = vmatprep.subr.mxu0 0.0
      %1025 = vmatpush1.msra.mxu0 0.0
      %1026 = vmatprep.subr.mxu0 0.0
      %1027 = vmatpush1.msra.mxu0 0.0
      %1028 = vmatprep.subr.mxu0 0.0
      %1029 = vmatpush1.msra.mxu0 0.0
      %1030 = vmatprep.subr.mxu0 0.0
      %1031 = vmatpush1.msra.mxu0 0.0
      %1032 = vmatprep.subr.mxu0 0.0
      %1033 = vmatpush1.msra.mxu0 0.0
      %1034 = vmatprep.subr.mxu0 0.0
      %1035 = vmatpush1.msra.mxu0 0.0
      %1036 = vmatprep.subr.mxu0 0.0
      %1037 = vmatpush1.msra.mxu0 0.0
      %1038 = vmatprep.subr.mxu0 0.0
      %1039 = vmatpush1.msra.mxu0 0.0
      %1040 = vmatprep.subr.mxu0 0.0
      %1041 = vmatpush1.msra.mxu0 0.0
      %1042 = vmatprep.subr.mxu0 0.0
      %1043 = vmatpush1.msra.mxu0 0.0
      %1044 = vmatprep.subr.mxu0 0.0
      %1045 = vmatpush1.msra.mxu0 0.0
      %1046 = vmatprep.subr.mxu0 0.0
      %1047 = vmatpush1.msra.mxu0 0.0
      %1048 = vmatprep.subr.mxu0 0.0
      %1049 = vmatpush1.msra.mxu0 0.0
      %1050 = vmatprep.subr.mxu0 0.0
      %1051 = vmatpush1.msra.mxu0 0.0
      %1052 = vmatprep.subr.mxu0 0.0
      %1053 = vmatpush1.msra.mxu0 0.0
      %1054 = vmatprep.subr.mxu0 0.0
      %1055 = vmatpush1.msra.mxu0 0.0
      %1056 = vmatprep.subr.mxu0 0.0
      %1057 = vmatpush1.msra.mxu0 0.0
      %1058 = vmatprep.subr.mxu0 0.0
      %1059 = vmatpush1.msra.mxu0 0.0
      %1060 = vmatprep.subr.mxu0 0.0
      %1061 = vmatpush1.msra.mxu0 0.0
      %1062 = vmatprep.subr.mxu0 0.0
      %1063 = vmatpush1.msra.mxu0 0.0
      %1064 = vmatprep.subr.mxu0 0.0
      %1065 = vmatpush1.msra.mxu0 0.0
      %1066 = vmatprep.subr.mxu0 0.0
      %1067 = vmatpush1.msra.mxu0 0.0
      %1068 = vmatprep.subr.mxu0 0.0
      %1069 = vmatpush1.msra.mxu0 0.0
      %1070 = vmatprep.subr.mxu0 0.0
      %1071 = vmatpush1.msra.mxu0 0.0
      %1072 = vmatprep.mubr.f32.mxu0 0.0
      %1073 = vmatmul.mubr.f32.gmra.mrb[0].mxu0 %v1006
      %v1074 = vpop.f32.mrb[0].mxu0
      %v1075 = vadd.f32 0.0, %v1074
      %v1076 = vpop.f32.mrb[0].mxu0
      %v1077 = vadd.f32 0.0, %v1076
      %1078 = vdwg.mxu0
      %v1079 = vadd.f32 %v1001, %v1075
      %v1080 = vadd.f32 %v1002, %v1077
      %1082 = vset.pattern.permute.xlu0 0
      %1083 = vperm.xlu0 %1082, %v261
      %v1084 = vpop.permute.xlu0 %1083
      %v1086 = vadd.f32 %v1079, %v1084
      %v1087 = vadd.f32 %v1080, %v1084
      %v1088 = vadd.f32 %v1086, %v1087
      %1089 = vadd.xlane.f32.xlu0 %v1088
      %v1090 = vpop.xlane.xlu0 %1089
      %v1091 = vrot.slane %v1090, 4
      %v1092 = vadd.f32 %v1090, %v1091
      %v1093 = vrot.slane %v1092, 2
      %v1094 = vadd.f32 %v1092, %v1093
      %v1095 = vrot.slane %v1094, 1
      %v1096 = vadd.f32 %v1094, %v1095
      %s1097 = vtos %v1096
      %s1098 = smul.f32 %s1097, 0.00048828125
      %v1099 = vmul.f32 %v1086, %v1086
      %v1100 = vmul.f32 %v1087, %v1087
      %v1101 = vadd.f32 %v1099, %v1100
      %1102 = vadd.xlane.f32.xlu0 %v1101
      %v1103 = vpop.xlane.xlu0 %1102
      %v1104 = vrot.slane %v1103, 4
      %v1105 = vadd.f32 %v1103, %v1104
      %v1106 = vrot.slane %v1105, 2
      %v1107 = vadd.f32 %v1105, %v1106
      %v1108 = vrot.slane %v1107, 1
      %v1109 = vadd.f32 %v1107, %v1108
      %s1110 = vtos %v1109
      %s1111 = smul.f32 %s1110, 0.00048828125
      %s1112 = smul.f32 %s1098, %s1098
      %s1113 = ssub.f32 %s1111, %s1112
      %v1114 = vstv %s1098
      %v1115 = vsub.f32 %v1086, %v1114
      %v1116 = vsub.f32 %v1087, %v1114
      %s1117 = sadd.f32 %s1113, 1e-05
      %v1118 = vstv %s1117
      %v1119 = vrsqrt.pop %v1118
      %s1120 = vtos %v1119
      %v1121 = vstv %s1120
      %v1122 = vmul.f32 %v1115, %v1121
      %v1123 = vmul.f32 %v1116, %v1121
      %1125 = vset.pattern.permute.xlu0 0
      %1126 = vperm.xlu0 %1125, %v263
      %v1127 = vpop.permute.xlu0 %1126
      %v1129 = vmul.f32 %v1122, %v1127
      %v1130 = vmul.f32 %v1123, %v1127
      %1132 = vset.pattern.permute.xlu0 0
      %1133 = vperm.xlu0 %1132, %v265
      %v1134 = vpop.permute.xlu0 %1133
      %v1136 = vadd.f32 %v1129, %v1134
      %v1137 = vadd.f32 %v1130, %v1134
      %v1138 = vsub.f32 0.0, %v1136
      %v1139 = vsub.f32 0.0, %v1137
      %v1140 = vmul.f32 %v1138, 1.442695
      %v1141 = vpow.pop %v1140
      %v1142 = vmul.f32 %v1139, 1.442695
      %v1143 = vpow.pop %v1142
      %v1144 = vadd.f32 %v1141, 1.0
      %v1145 = vadd.f32 %v1143, 1.0
      %v1146 = vrcp.pop %v1144
      %v1147 = vrcp.pop %v1145
      %v1148 = vmul.f32 %v1136, %v1146
      %v1149 = vmul.f32 %v1137, %v1147
      %v1150 = vld [vmem:[%s3] sm:$0xff]
      %1152 = vset.pattern.permute.xlu0 0
      %1153 = vperm.xlu0 %1152, %v267
      %v1154 = vpop.permute.xlu0 %1153
      %v1157 = vsel %vm345, %v1150, 0
      %1159 = vmatprep.subr.mxu0 %v432
      %1160 = vmatpush1.msra.mxu0 %v430
      %1161 = vmatprep.subr.mxu0 0.0
      %1162 = vmatpush1.msra.mxu0 0.0
      %1163 = vmatprep.subr.mxu0 0.0
      %1164 = vmatpush1.msra.mxu0 0.0
      %1165 = vmatprep.subr.mxu0 0.0
      %1166 = vmatpush1.msra.mxu0 0.0
      %1167 = vmatprep.subr.mxu0 0.0
      %1168 = vmatpush1.msra.mxu0 0.0
      %1169 = vmatprep.subr.mxu0 0.0
      %1170 = vmatpush1.msra.mxu0 0.0
      %1171 = vmatprep.subr.mxu0 0.0
      %1172 = vmatpush1.msra.mxu0 0.0
      %1173 = vmatprep.subr.mxu0 0.0
      %1174 = vmatpush1.msra.mxu0 0.0
      %1175 = vmatprep.subr.mxu0 0.0
      %1176 = vmatpush1.msra.mxu0 0.0
      %1177 = vmatprep.subr.mxu0 0.0
      %1178 = vmatpush1.msra.mxu0 0.0
      %1179 = vmatprep.subr.mxu0 0.0
      %1180 = vmatpush1.msra.mxu0 0.0
      %1181 = vmatprep.subr.mxu0 0.0
      %1182 = vmatpush1.msra.mxu0 0.0
      %1183 = vmatprep.subr.mxu0 0.0
      %1184 = vmatpush1.msra.mxu0 0.0
      %1185 = vmatprep.subr.mxu0 0.0
      %1186 = vmatpush1.msra.mxu0 0.0
      %1187 = vmatprep.subr.mxu0 0.0
      %1188 = vmatpush1.msra.mxu0 0.0
      %1189 = vmatprep.subr.mxu0 0.0
      %1190 = vmatpush1.msra.mxu0 0.0
      %1191 = vmatprep.subr.mxu0 0.0
      %1192 = vmatpush1.msra.mxu0 0.0
      %1193 = vmatprep.subr.mxu0 0.0
      %1194 = vmatpush1.msra.mxu0 0.0
      %1195 = vmatprep.subr.mxu0 0.0
      %1196 = vmatpush1.msra.mxu0 0.0
      %1197 = vmatprep.subr.mxu0 0.0
      %1198 = vmatpush1.msra.mxu0 0.0
      %1199 = vmatprep.subr.mxu0 0.0
      %1200 = vmatpush1.msra.mxu0 0.0
      %1201 = vmatprep.subr.mxu0 0.0
      %1202 = vmatpush1.msra.mxu0 0.0
      %1203 = vmatprep.subr.mxu0 0.0
      %1204 = vmatpush1.msra.mxu0 0.0
      %1205 = vmatprep.subr.mxu0 0.0
      %1206 = vmatpush1.msra.mxu0 0.0
      %1207 = vmatprep.subr.mxu0 0.0
      %1208 = vmatpush1.msra.mxu0 0.0
      %1209 = vmatprep.subr.mxu0 0.0
      %1210 = vmatpush1.msra.mxu0 0.0
      %1211 = vmatprep.subr.mxu0 0.0
      %1212 = vmatpush1.msra.mxu0 0.0
      %1213 = vmatprep.subr.mxu0 0.0
      %1214 = vmatpush1.msra.mxu0 0.0
      %1215 = vmatprep.subr.mxu0 0.0
      %1216 = vmatpush1.msra.mxu0 0.0
      %1217 = vmatprep.subr.mxu0 0.0
      %1218 = vmatpush1.msra.mxu0 0.0
      %1219 = vmatprep.subr.mxu0 0.0
      %1220 = vmatpush1.msra.mxu0 0.0
      %1221 = vmatprep.subr.mxu0 0.0
      %1222 = vmatpush1.msra.mxu0 0.0
      %1223 = vmatprep.mubr.f32.mxu0 0.0
      %1224 = vmatmul.mubr.f32.gmra.mrb[0].mxu0 %v1157
      %v1225 = vpop.f32.mrb[0].mxu0
      %v1226 = vadd.f32 %v1154, %v1225
      %v1227 = vpop.f32.mrb[0].mxu0
      %v1228 = vadd.f32 %v1154, %v1227
      %1229 = vdwg.mxu0
      %v1230 = vsub.f32 0.0, %v1226
      %v1231 = vsub.f32 0.0, %v1228
      %v1232 = vmul.f32 %v1230, 1.442695
      %v1233 = vpow.pop %v1232
      %v1234 = vmul.f32 %v1231, 1.442695
      %v1235 = vpow.pop %v1234
      %v1236 = vadd.f32 %v1233, 1.0
      %v1237 = vadd.f32 %v1235, 1.0
      %v1238 = vrcp.pop %v1236
      %v1239 = vrcp.pop %v1237
      %v1240 = vmul.f32 %v1226, %v1238
      %v1241 = vmul.f32 %v1228, %v1239
      %v1242 = vadd.f32 %v1240, %v1241
      %1243 = vadd.xlane.f32.xlu0 %v1242
      %v1244 = vpop.xlane.xlu0 %1243
      %v1245 = vrot.slane %v1244, 4
      %v1246 = vadd.f32 %v1244, %v1245
      %v1247 = vrot.slane %v1246, 2
      %v1248 = vadd.f32 %v1246, %v1247
      %v1249 = vrot.slane %v1248, 1
      %v1250 = vadd.f32 %v1248, %v1249
      %s1251 = vtos %v1250
      %s1252 = smul.f32 %s1251, 0.00048828125
      %v1253 = vmul.f32 %v1240, %v1240
      %v1254 = vmul.f32 %v1241, %v1241
      %v1255 = vadd.f32 %v1253, %v1254
      %1256 = vadd.xlane.f32.xlu0 %v1255
      %v1257 = vpop.xlane.xlu0 %1256
      %v1258 = vrot.slane %v1257, 4
      %v1259 = vadd.f32 %v1257, %v1258
      %v1260 = vrot.slane %v1259, 2
      %v1261 = vadd.f32 %v1259, %v1260
      %v1262 = vrot.slane %v1261, 1
      %v1263 = vadd.f32 %v1261, %v1262
      %s1264 = vtos %v1263
      %s1265 = smul.f32 %s1264, 0.00048828125
      %s1266 = smul.f32 %s1252, %s1252
      %s1267 = ssub.f32 %s1265, %s1266
      %v1268 = vstv %s1252
      %v1269 = vsub.f32 %v1240, %v1268
      %v1270 = vsub.f32 %v1241, %v1268
      %s1271 = sadd.f32 %s1267, 1e-05
      %v1272 = vstv %s1271
      %v1273 = vrsqrt.pop %v1272
      %s1274 = vtos %v1273
      %v1275 = vstv %s1274
      %v1276 = vmul.f32 %v1269, %v1275
      %v1277 = vmul.f32 %v1270, %v1275
      %1279 = vset.pattern.permute.xlu0 0
      %1280 = vperm.xlu0 %1279, %v269
      %v1281 = vpop.permute.xlu0 %1280
      %v1283 = vmul.f32 %v1276, %v1281
      %v1284 = vmul.f32 %v1277, %v1281
      %1286 = vset.pattern.permute.xlu0 0
      %1287 = vperm.xlu0 %1286, %v271
      %v1288 = vpop.permute.xlu0 %1287
      %v1290 = vadd.f32 %v1283, %v1288
      %v1291 = vadd.f32 %v1284, %v1288
      %v1292 = vadd.f32 %v1148, %v1290
      %v1293 = vadd.f32 %v1149, %v1291
      %1294 = vst [vmem:[%s251] sm:$0xff] %v1292
      %1295 = vst [vmem:[%s251 + $0x8] sm:$0xff] %v1293
      %p1296 = scmp.lt.s32.totalorder %s17, 1
      %s1297 = scalar_select %p1296, %s17, 1
      %s1298 = smul.addr %s1297, 2
      %s1299 = smul.addr %s1298, 8
      %s1300 = scalar_lea.vmem %s6, %s1299
      // Predicated region
      $region45: #{unet_layer_forward.1} parent=43 // pred_check
        %p1301 = pneg %p166
      $region46: #{unet_layer_forward.1} parent=43 // pred_check_branch
        %1303 = sbr.rel (%p1301) target = $region48
      $region47: #{unet_layer_forward.1} parent=43 // pred_region
        _
      $region48: #{unet_layer_forward.1} parent=43 // pred_fallthru
        _
    $region44: #{unet_layer_forward.1} parent=5 // pred_fallthru
      _
    %p1304 = scmp.le.s32.totalorder 2, %s12
    // Predicated region
    $region49: #{unet_layer_forward.1} parent=5 // pred_check
      %p1305 = pneg %p1304
    $region50: #{unet_layer_forward.1} parent=5 // pred_check_branch
      %1307 = sbr.rel (%p1305) target = $region52
    $region51: #{unet_layer_forward.1} parent=5 // pred_region
      %s1308 = ssub.s32 %s12, 2
      // Predicated region
      $region53: #{unet_layer_forward.1} parent=51 // pred_check
        %p1309 = pneg %p172
      $region54: #{unet_layer_forward.1} parent=51 // pred_check_branch
        %1311 = sbr.rel (%p1309) target = $region56
      $region55: #{unet_layer_forward.1} parent=51 // pred_region
        %p1312 = scmp.lt.s32.totalorder %s18, 1
        %s1313 = scalar_select %p1312, %s18, 1
        %s1314 = smul.addr %s1313, 2
        %s1315 = smul.addr %s1314, 8
        %s1316 = scalar_lea.vmem %s6, %s1315
      $region56: #{unet_layer_forward.1} parent=51 // pred_fallthru
        _
    $region52: #{unet_layer_forward.1} parent=5 // pred_fallthru
      _
  $region6: #{unet_layer_forward.1} parent=0 // loop_footer
    %s16 = sadd.s32 1, %s12
  $region7: #{unet_layer_forward.1} parent=0 // loop_footer_branch
    %11 = sbr.rel target = $region3
  $region8: #{unet_layer_forward.1} parent=0 // loop_exit
    _

</llo_original>
